<compile_context>
chip_gen: v6e
topology: v6e:2x2x1
jax: 0.10.0
libtpu: 0.0.40
codegen_flags: <defaults>
</compile_context>

<pallas_src>
import functools

import jax
import jax.numpy as jnp
from jax import lax
from jax.experimental import pallas as pl
from jax.experimental.pallas import tpu as pltpu


def _round_up(v, m):
    return (v + m - 1) // m * m


def _cdiv(a, b):
    return (a + b - 1) // b


# ---------------------------------------------------------------------------
# Best-effort hardware introspection (safe fallbacks off-TPU / interpret mode).
# ---------------------------------------------------------------------------
def _on_tpu():
    try:
        return jax.default_backend() == "tpu"
    except Exception:
        return False


def _vmem_capacity_bytes():
    try:
        return int(pltpu.get_tpu_info().vmem_capacity_bytes)
    except Exception:
        return 64 * 1024 * 1024          # conservative: v7x per-TensorCore VMEM


def _tensorcores_per_chip():
    # Only chips exposing 2 TensorCores per device (v7x, and the fused-megacore
    # v4/v5p parts) benefit from >= 2 "parallel" grid cells; v5e/v6e are 1 TC.
    try:
        kind = jax.devices()[0].device_kind.lower()
    except Exception:
        return 1
    return 2 if any(tag in kind for tag in ("v7", "v4", "v5p")) else 1


# ---------------------------------------------------------------------------
# Kernel
# ---------------------------------------------------------------------------
def _linear_relu_dropout_kernel(seed_ref, x_ref, w_ref, b_ref, o_ref,
                                *acc_scratch,
                                compute_dtype, apply_dropout, drop_all,
                                use_hw_prng, keep_threshold, inv_keep_prob):
    # seed_ref: SMEM (1,) int32      x_ref: (bm, bk)    w_ref: (bk, bn)
    # b_ref:    (1, bn) f32          o_ref: (bm, bn)    acc_scratch: optional (bm, bn) f32
    xv = x_ref[...]
    wv = w_ref[...]
    if compute_dtype is not None:
        # Per-tile cast (VPU, hidden under the DMA) -> no extra HBM pass over x.
        if xv.dtype != compute_dtype:
            xv = xv.astype(compute_dtype)
        if wv.dtype != compute_dtype:
            wv = wv.astype(compute_dtype)

    def epilogue(acc_f32):
        out = jnp.maximum(acc_f32 + b_ref[...].astype(jnp.float32), 0.0)
        if drop_all:                      # dropout_rate >= 1.0
            out = jnp.zeros_like(out)
        elif apply_dropout:
            i = pl.program_id(0)
            j = pl.program_id(1)
            if use_hw_prng:
                # One PRNG stream per (i, j) output tile so the "parallel" grid
                # axes remain valid; seed is a runtime SMEM scalar.
                pltpu.prng_seed(seed_ref[0] + i * pl.num_programs(1) + j)
                bits = pltpu.prng_random_bits(out.shape)
                if bits.dtype != jnp.uint32:
                    bits = pltpu.bitcast(bits, jnp.uint32)
            else:
                # Portable counter-based hash (CPU interpret fallback only).
                rows = lax.broadcasted_iota(jnp.uint32, out.shape, 0)
                cols = lax.broadcasted_iota(jnp.uint32, out.shape, 1)
                rows = rows + (i * out.shape[0]).astype(jnp.uint32)
                cols = cols + (j * out.shape[1]).astype(jnp.uint32)
                h = (rows * jnp.uint32(0x9E3779B1)) ^ (cols * jnp.uint32(0x85EBCA77))
                h = h + seed_ref[0].astype(jnp.uint32) * jnp.uint32(0xC2B2AE3D)
                h = h ^ (h >> 16)
                h = h * jnp.uint32(0x7FEB352D)
                h = h ^ (h >> 15)
                h = h * jnp.uint32(0x846CA68B)
                h = h ^ (h >> 16)
                bits = h
            keep = bits < jnp.uint32(keep_threshold)
            out = jnp.where(keep, out * inv_keep_prob, 0.0)
        o_ref[...] = out.astype(o_ref.dtype)

    if acc_scratch:
        # K-tiled path: accumulate partial products across the "arbitrary" axis.
        acc_ref = acc_scratch[0]

        @pl.when(pl.program_id(2) == 0)
        def _():
            acc_ref[...] = jnp.zeros_like(acc_ref)

        acc_ref[...] += jnp.dot(xv, wv, preferred_element_type=jnp.float32)

        @pl.when(pl.program_id(2) == pl.num_programs(2) - 1)
        def _():
            epilogue(acc_ref[...])
    else:
        # Single K tile: no scratch accumulator, write the tile directly.
        epilogue(jnp.dot(xv, wv, preferred_element_type=jnp.float32))


# ---------------------------------------------------------------------------
# Wrapper
# ---------------------------------------------------------------------------
@functools.partial(
    jax.jit,
    static_argnames=("block_m", "block_n", "block_k", "training",
                     "dropout_rate", "compute_dtype"),
)
def summation_dt_resnet_forward(x, w, b, dropout_seed=0, *, block_m=1024,
                                block_n=2048, block_k=2048,
                                training=False, dropout_rate=0.5,
                                compute_dtype=jnp.bfloat16):
    """SummationDTResnet forward: dropout(relu(x @ w + b)).

    x : [..., feature_length]                  (float32 or bfloat16)
    w : [feature_length, embedding_length]     (transposed vs torch .weight)
    b : [embedding_length]
    dropout_seed : runtime int32 scalar (no recompile when it changes).
    training=False -> dropout is the identity (module.eval()).
    training=True  -> inverted dropout via the TPU hardware PRNG (statistically
                      equivalent to torch's, not bit-identical; the mask also
                      depends on the tiling choice).
    compute_dtype  -> dtype fed to the MXU (default bfloat16, f32 accumulation);
                      None keeps the input dtype.
    """
    orig_shape = x.shape
    feat = orig_shape[-1]
    emb = w.shape[1]
    out_dtype = x.dtype

    x2d = x.reshape(-1, feat)
    tokens = x2d.shape[0]

    cd = None if compute_dtype is None else jnp.dtype(compute_dtype)
    # Weight/bias are small & reusable: cast wrapper-side.  x stays in its
    # original dtype in HBM and is cast per-tile inside the kernel.
    wk = w.astype(cd) if (cd is not None and w.dtype != cd) else w
    b2d = b.reshape(1, emb).astype(jnp.float32)

    # ---- TPU-friendly padded extents (lane = 128) ---------------------------
    feat_p = _round_up(feat, 128)        # contraction dim (must be zero-padded)
    emb_p = _round_up(emb, 128)          # lane-dense output stores

    # ---- tile selection ------------------------------------------------------
    # K (contraction): full feat_p if it fits the cap, else balanced 128-mult.
    k_cap = max(128, _round_up(min(block_k, feat_p), 128))
    gk = _cdiv(feat_p, k_cap)
    bk = _round_up(_cdiv(feat_p, gk), 128)
    # N (embedding): full emb_p if it fits, else balanced 128-mult; the last N
    # tile may be ragged (masked store) instead of padding emb up to bn.
    n_cap = max(128, _round_up(min(block_n, emb_p), 128))
    gn = _cdiv(emb_p, n_cap)
    bn = _round_up(_cdiv(emb_p, gn), 128)
    # M (tokens): balanced tile; the ragged last tile is masked by Pallas, so
    # no jnp.pad of the activation along tokens (and no out[:tokens] slice).
    m_cap = max(8, _round_up(min(block_m, max(tokens, 1)), 8))
    gm = _cdiv(max(tokens, 1), m_cap)
    bm = _round_up(_cdiv(max(tokens, 1), gm), 8)

    # Split the token tile for the second TensorCore only on chips that have
    # one; on single-TC v5e/v6e a split grid is just a slower sequential loop.
    if _tensorcores_per_chip() >= 2 and tokens >= 512 and _cdiv(tokens, bm) * gn < 2:
        bm = _round_up(_cdiv(tokens, 2), 8)

    # ---- VMEM budget (generation aware) -------------------------------------
    x_bytes = jnp.dtype(x.dtype).itemsize
    w_bytes = jnp.dtype(wk.dtype).itemsize
    o_bytes = jnp.dtype(out_dtype).itemsize
    vmem_budget = max(32 * 1024 * 1024, int(0.85 * _vmem_capacity_bytes()))

    def _tile_bytes(bm_, bn_, bk_):
        return (2 * bm_ * bk_ * x_bytes        # x tile (double buffered)
                + 2 * bk_ * bn_ * w_bytes      # weight tile (conservative: 2 bufs)
                + 2 * bn_ * 4                  # bias tile
                + 2 * bm_ * bn_ * o_bytes      # output tile
                + bm_ * bn_ * 4)               # f32 accumulator scratch

    while _tile_bytes(bm, bn, bk) > vmem_budget:
        if bm > 256:
            bm = max(256, _round_up(bm // 2, 8))
        elif bk > 512:
            bk = max(512, _round_up(bk // 2, 128))
        elif bn > 256:
            bn = max(256, _round_up(bn // 2, 128))
        elif bk > 128:
            bk = max(128, _round_up(bk // 2, 128))
        elif bn > 128:
            bn = max(128, _round_up(bn // 2, 128))
        elif bm > 8:
            bm = max(8, _round_up(bm // 2, 8))
        else:
            break

    gm = _cdiv(max(tokens, 1), bm)
    gn = _cdiv(emb_p, bn)
    # K tiles must be fully in-bounds (garbage along the contraction dim would
    # corrupt results), so pad feat up to a bk multiple with zeros (inert).
    feat_pad = _round_up(feat_p, bk)
    gk = feat_pad // bk

    # ---- zero-pad only where required ---------------------------------------
    xk = x2d if feat_pad == feat else jnp.pad(x2d, ((0, 0), (0, feat_pad - feat)))
    if feat_pad != feat or emb_p != emb:
        wk = jnp.pad(wk, ((0, feat_pad - feat), (0, emb_p - emb)))
    if emb_p != emb:
        b2d = jnp.pad(b2d, ((0, 0), (0, emb_p - emb)))

    # ---- resident weight: single pipeline buffer when its block never moves --
    w_tile_bytes = bk * bn * w_bytes
    single_buffer_w = (_on_tpu() and gn == 1 and gk == 1
                       and w_tile_bytes >= (4 << 20))
    w_spec_kwargs = dict(pipeline_mode=pl.Buffered(1)) if single_buffer_w else {}

    # ---- dropout parameters ---------------------------------------------------
    keep_prob = 1.0 - float(dropout_rate)
    apply_dropout = bool(training) and 0.0 < float(dropout_rate) < 1.0
    drop_all = bool(training) and float(dropout_rate) >= 1.0
    keep_threshold = (min(2 ** 32 - 1, int(round(keep_prob * (2 ** 32))))
                      if apply_dropout else 0)

    kernel = functools.partial(
        _linear_relu_dropout_kernel,
        compute_dtype=cd,
        apply_dropout=apply_dropout,
        drop_all=drop_all,
        use_hw_prng=_on_tpu(),
        keep_threshold=keep_threshold,
        inv_keep_prob=(1.0 / keep_prob) if keep_prob > 0.0 else 0.0,
    )

    # ---- advisory cost estimate ----------------------------------------------
    w_restream = 1 if (gn == 1 and gk == 1) else gm
    cost = pl.CostEstimate(
        flops=2 * tokens * feat_pad * emb_p,
        transcendentals=0,
        bytes_accessed=(tokens * feat_pad * x_bytes * gn
                        + feat_pad * emb_p * w_bytes * w_restream
                        + tokens * emb_p * o_bytes
                        + emb_p * 4),
    )

    seed_arr = jnp.asarray(dropout_seed, dtype=jnp.int32).reshape((1,))
    scratch_shapes = [pltpu.VMEM((bm, bn), jnp.float32)] if gk > 1 else []

    out = pl.pallas_call(
        kernel,
        out_shape=jax.ShapeDtypeStruct((tokens, emb_p), out_dtype),
        grid_spec=pltpu.PrefetchScalarGridSpec(
            num_scalar_prefetch=1,
            grid=(gm, gn, gk),
            in_specs=[
                pl.BlockSpec((bm, bk), lambda i, j, k, s: (i, k)),                 # x
                pl.BlockSpec((bk, bn), lambda i, j, k, s: (k, j), **w_spec_kwargs),  # w
                pl.BlockSpec((1, bn), lambda i, j, k, s: (0, j)),                  # bias
            ],
            out_specs=pl.BlockSpec((bm, bn), lambda i, j, k, s: (i, j)),
            scratch_shapes=scratch_shapes,
        ),
        compiler_params=pltpu.CompilerParams(
            dimension_semantics=("parallel", "parallel", "arbitrary"),
            vmem_limit_bytes=int(vmem_budget),
        ),
        cost_estimate=cost,
    )(seed_arr, xk, wk, b2d)

    if emb_p != emb:
        out = out[:, :emb]
    return out.reshape(*orig_shape[:-1], emb)


# ---------------------------------------------------------------------------
# Test helpers
# ---------------------------------------------------------------------------
def _torch_style_linear_init(key, in_features, out_features):
    """Deterministic init matching nn.Linear's uniform(-1/sqrt(in), 1/sqrt(in))."""
    kw, kb = jax.random.split(key)
    bound = 1.0 / (in_features ** 0.5)
    w_torch = jax.random.uniform(
        kw, (out_features, in_features), jnp.float32, -bound, bound)
    b = jax.random.uniform(kb, (out_features,), jnp.float32, -bound, bound)
    return w_torch.T, b  # kernel wants (in, out)


def _reference(x, w, b, compute_dtype=jnp.bfloat16):
    """relu(x @ w + b) with the same compute-dtype policy as the kernel."""
    f = x.shape[-1]
    xr = x.reshape(-1, f)
    wr = w
    if compute_dtype is not None:
        xr = xr.astype(compute_dtype)
        wr = wr.astype(compute_dtype)
    y = jnp.dot(xr, wr, preferred_element_type=jnp.float32)
    y = jnp.maximum(y + b.astype(jnp.float32), 0.0).astype(x.dtype)
    return y.reshape(*x.shape[:-1], w.shape[1])


if __name__ == "__main__":
    key = jax.random.PRNGKey(0)
    k1, k2, k3, k4, k5, k6 = jax.random.split(key, 6)

    # ---- Test 1: module-default sizes (feature_length=512, embedding=1024) --
    batch, seq = 2, 8
    feature_length, emb_len = 512, 1024
    x = jax.random.normal(k1, (batch, seq, feature_length), jnp.float32)
    w, b = _torch_style_linear_init(k2, feature_length, emb_len)

    out = jax.block_until_ready(summation_dt_resnet_forward(x, w, b))
    ref = _reference(x, w, b, jnp.bfloat16)
    assert out.shape == (batch, seq, emb_len)
    assert jnp.allclose(out, ref, atol=5e-3, rtol=5e-3), \
        float(jnp.max(jnp.abs(out - ref)))

    # f32 compute path (tight tolerance against exact f32 reference).
    out32 = jax.block_until_ready(
        summation_dt_resnet_forward(x, w, b, compute_dtype=None))
    ref32 = _reference(x, w, b, None)
    assert jnp.allclose(out32, ref32, atol=1e-4, rtol=1e-4), \
        float(jnp.max(jnp.abs(out32 - ref32)))

    # ---- Test 2: ragged sizes (feat pad, emb pad + slice, ragged token tile) -
    b2, s2, f2, e2 = 3, 5, 200, 96
    x2 = jax.random.normal(k3, (b2, s2, f2), jnp.float32)
    w2, bb2 = _torch_style_linear_init(k4, f2, e2)
    out2 = jax.block_until_ready(summation_dt_resnet_forward(x2, w2, bb2))
    ref2 = _reference(x2, w2, bb2, jnp.bfloat16)
    assert out2.shape == (b2, s2, e2)
    assert jnp.allclose(out2, ref2, atol=5e-3, rtol=5e-3), \
        float(jnp.max(jnp.abs(out2 - ref2)))

    # ---- Test 3: K/N-tiled path (VMEM accumulator + pl.when init/finalize) ---
    b3, s3, f3, e3 = 2, 8, 384, 384
    x3 = jax.random.normal(k5, (b3, s3, f3), jnp.float32)
    w3, bb3 = _torch_style_linear_init(k6, f3, e3)
    out3 = jax.block_until_ready(
        summation_dt_resnet_forward(x3, w3, bb3, block_k=128, block_n=128))
    ref3 = _reference(x3, w3, bb3, jnp.bfloat16)
    assert out3.shape == (b3, s3, e3)
    assert jnp.allclose(out3, ref3, atol=5e-3, rtol=5e-3), \
        float(jnp.max(jnp.abs(out3 - ref3)))

    # ---- Test 4: train-mode dropout (structural check) ------------------------
    out_t = jax.block_until_ready(
        summation_dt_resnet_forward(x, w, b, dropout_seed=123, training=True))
    doubled = 2.0 * out                      # eval-mode kernel output, scaled
    ok = jnp.isclose(out_t, 0.0, atol=1e-6) | \
        jnp.isclose(out_t, doubled, rtol=1e-3, atol=1e-3)
    assert bool(jnp.all(ok))
    pos = doubled > 1e-3
    drop_frac = float(jnp.sum((out_t == 0.0) & pos) / jnp.sum(pos))
    assert 0.3 < drop_frac < 0.7, drop_frac

    print("KERNEL_OK")
</pallas_src>

<mosaic_0001>
module attributes {stable_mosaic.version = 11 : i64} {
  func.func @_linear_relu_dropout_kernel(%arg0: i32, %arg1: i32, %arg2: i32, %arg3: memref<1xi32, #tpu.memory_space<smem>>, %arg4: memref<16x512xf32, #tpu.memory_space<vmem>>, %arg5: memref<512x1024xbf16, #tpu.memory_space<vmem>>, %arg6: memref<1x1024xf32, #tpu.memory_space<vmem>>, %arg7: memref<16x1024xf32, #tpu.memory_space<vmem>>) attributes {dimension_semantics = [#tpu.dimension_semantics<parallel>, #tpu.dimension_semantics<parallel>, #tpu.dimension_semantics<arbitrary>], iteration_bounds = array<i64: 1, 1, 1>, scalar_prefetch = 1 : i64, scratch_operands = 0 : i64, tpu.core_type = #tpu.core_type<tc>, window_params = [{transform_indices = @transform_0, window_bounds = array<i64: 16, 512>}, {transform_indices = @transform_1, window_bounds = array<i64: 512, 1024>}, {transform_indices = @transform_2, window_bounds = array<i64: 1, 1024>}, {transform_indices = @transform_3, window_bounds = array<i64: 16, 1024>}]} {
    %c0 = arith.constant 0 : index
    %c0_0 = arith.constant 0 : index
    %0 = vector.load %arg4[%c0, %c0_0] : memref<16x512xf32, #tpu.memory_space<vmem>>, vector<16x512xf32>
    %c0_1 = arith.constant 0 : index
    %c0_2 = arith.constant 0 : index
    %1 = vector.load %arg5[%c0_1, %c0_2] : memref<512x1024xbf16, #tpu.memory_space<vmem>>, vector<512x1024xbf16>
    %2 = arith.truncf %0 : vector<16x512xf32> to vector<16x512xbf16>
    %cst = arith.constant dense<0.000000e+00> : vector<16x1024xf32>
    %3 = tpu.matmul %2, %1, %cst {dimension_numbers = #tpu.dot_dimension_numbers<[1], [0], [0], [1], [0, 0, 1, 1], [], []>} : vector<16x512xbf16>, vector<512x1024xbf16>, vector<16x1024xf32> -> vector<16x1024xf32>
    %c0_3 = arith.constant 0 : index
    %c0_4 = arith.constant 0 : index
    %4 = vector.load %arg6[%c0_3, %c0_4] : memref<1x1024xf32, #tpu.memory_space<vmem>>, vector<1x1024xf32>
    %5 = vector.broadcast %4 : vector<1x1024xf32> to vector<16x1024xf32>
    %6 = arith.addf %3, %5 : vector<16x1024xf32>
    %cst_5 = arith.constant 0.000000e+00 : f32
    %7 = vector.broadcast %cst_5 : f32 to vector<16x1024xf32>
    %8 = arith.maximumf %6, %7 : vector<16x1024xf32>
    %c0_6 = arith.constant 0 : index
    %c0_7 = arith.constant 0 : index
    %9 = vector.load %arg7[%c0_6, %c0_7] : memref<16x1024xf32, #tpu.memory_space<vmem>>, vector<16x1024xf32>
    tpu.vector_store %arg7[%c0_6, %c0_7], %8 {strides = array<i32>} : memref<16x1024xf32, #tpu.memory_space<vmem>>, vector<16x1024xf32>,
    return
  }
  func.func @transform_0(%arg0: i32, %arg1: i32, %arg2: i32, %arg3: memref<1xi32, #tpu.memory_space<smem>>) -> (i32, i32) {
    %c0_i32 = arith.constant 0 : i32
    return %arg0, %arg2 : i32, i32
  }
  func.func @transform_1(%arg0: i32, %arg1: i32, %arg2: i32, %arg3: memref<1xi32, #tpu.memory_space<smem>>) -> (i32, i32) {
    %c0_i32 = arith.constant 0 : i32
    return %arg2, %arg1 : i32, i32
  }
  func.func @transform_2(%arg0: i32, %arg1: i32, %arg2: i32, %arg3: memref<1xi32, #tpu.memory_space<smem>>) -> (i32, i32) {
    %c0_i32 = arith.constant 0 : i32
    %c0_i32_0 = arith.constant 0 : i32
    return %c0_i32, %arg1 : i32, i32
  }
  func.func @transform_3(%arg0: i32, %arg1: i32, %arg2: i32, %arg3: memref<1xi32, #tpu.memory_space<smem>>) -> (i32, i32) {
    %c0_i32 = arith.constant 0 : i32
    return %arg0, %arg1 : i32, i32
  }
}

</mosaic_0001>

<llo_original>
// kernel: summation_dt_resnet_forward.1
$region0: #{summation_dt_resnet_forward.1}
  #allocation0 [shape = 'u32[]', space=smem, size = 0x4, offset = 0x4, fixed_abs, tag = 'smem constant byte address 0x4 - core index']
  #allocation1 [shape = 'u32[144,128]{1,0:T(1,128)}', space=vmem, size = 0x12000, scoped, tag = 'internal scratch']
  #allocation2 [shape = 's32[1]{0}', space=sflag, size = 0x4, scoped, tag = 'scoped memory for summation_dt_resnet_forward.1']
  #allocation3 [shape = 's32[1]{0:T(128)S(6)}', space=smem, size = 0x200, scoped, tag = 'prefetched SMEM operand 0']
  %s0 = inlined_call_operand.<no memory space> [shape: s32[1], index: 0, kind: input, shape index: {}]
  %s1 = inlined_call_operand.vmem [shape: f32[16,512], index: 1, kind: input, shape index: {}]
  %s2 = inlined_call_operand.vmem [shape: bf16[512,1024], index: 2, kind: input, shape index: {}]
  %s3 = inlined_call_operand.vmem [shape: f32[1,1024], index: 3, kind: input, shape index: {}]
  %s4 = inlined_call_operand.hbm [shape: f32[16,1024], index: 4, kind: output, shape index: {}]
  %s5 = sld [smem:[#allocation0]]
  $region22: #{summation_dt_resnet_forward.1} parent=0
    _
  %s7 = ssub.s32 1, %s5
  %s8 = scalar_select 0, %s7, %s5
  %9 = sst [smem:[#allocation3]] %s0
  $region1: #{summation_dt_resnet_forward.1} parent=0
    #allocation4 [shape = 'u8[65536]{0}', space=vmem, size = 0x10000, scoped, tag = 'output window, operand 0, single buffered']
    #allocation5 [shape = 's32[1]{0}', space=sflag, size = 0x4, scoped, tag = 'scoped memory for summation_dt_resnet_forward.1']
    %10 = vsyncpa [#allocation5], 0
    // Predicated region
    $region2: #{summation_dt_resnet_forward.1} parent=1 // pred_check
      _
    $region3: #{summation_dt_resnet_forward.1} parent=1 // pred_check_branch
      %12 = sbr.rel (0) target = $region5
    $region4: #{summation_dt_resnet_forward.1} parent=1 // pred_region
      _
    $region5: #{summation_dt_resnet_forward.1} parent=1 // pred_fallthru
      _
    // Predicated region
    $region6: #{summation_dt_resnet_forward.1} parent=1 // pred_check
      _
    $region7: #{summation_dt_resnet_forward.1} parent=1 // pred_check_branch
      %14 = sbr.rel (0) target = $region9
    $region8: #{summation_dt_resnet_forward.1} parent=1 // pred_region
      _
    $region9: #{summation_dt_resnet_forward.1} parent=1 // pred_fallthru
      _
    // Predicated region
    $region10: #{summation_dt_resnet_forward.1} parent=1 // pred_check
      _
    $region11: #{summation_dt_resnet_forward.1} parent=1 // pred_check_branch
      %16 = sbr.rel (0) target = $region13
    $region12: #{summation_dt_resnet_forward.1} parent=1 // pred_region
      _
    $region13: #{summation_dt_resnet_forward.1} parent=1 // pred_fallthru
      _
    %v17 = vld [vmem:[%s1] sm:$0xff]
    %v18 = vld [vmem:[%s1 + $0x8] sm:$0xff]
    %v19 = vld [vmem:[%s1 + $0x10] sm:$0xff]
    %v20 = vld [vmem:[%s1 + $0x18] sm:$0xff]
    %v21 = vld [vmem:[%s1 + $0x20] sm:$0xff]
    %v22 = vld [vmem:[%s1 + $0x28] sm:$0xff]
    %v23 = vld [vmem:[%s1 + $0x30] sm:$0xff]
    %v24 = vld [vmem:[%s1 + $0x38] sm:$0xff]
    %v25 = vld [vmem:[%s2] sm:$0xff]
    %v26 = vld [vmem:[%s2 + $0x8] sm:$0xff]
    %v27 = vld [vmem:[%s2 + $0x10] sm:$0xff]
    %v28 = vld [vmem:[%s2 + $0x18] sm:$0xff]
    %v29 = vld [vmem:[%s2 + $0x20] sm:$0xff]
    %v30 = vld [vmem:[%s2 + $0x28] sm:$0xff]
    %v31 = vld [vmem:[%s2 + $0x30] sm:$0xff]
    %v32 = vld [vmem:[%s2 + $0x38] sm:$0xff]
    %v33 = vld [vmem:[%s2 + $0x40] sm:$0xff]
    %v34 = vld [vmem:[%s2 + $0x48] sm:$0xff]
    %v35 = vld [vmem:[%s2 + $0x50] sm:$0xff]
    %v36 = vld [vmem:[%s2 + $0x58] sm:$0xff]
    %v37 = vld [vmem:[%s2 + $0x60] sm:$0xff]
    %v38 = vld [vmem:[%s2 + $0x68] sm:$0xff]
    %v39 = vld [vmem:[%s2 + $0x70] sm:$0xff]
    %v40 = vld [vmem:[%s2 + $0x78] sm:$0xff]
    %v41 = vld [vmem:[%s2 + $0x80] sm:$0xff]
    %v42 = vld [vmem:[%s2 + $0x88] sm:$0xff]
    %v43 = vld [vmem:[%s2 + $0x90] sm:$0xff]
    %v44 = vld [vmem:[%s2 + $0x98] sm:$0xff]
    %v45 = vld [vmem:[%s2 + $0xa0] sm:$0xff]
    %v46 = vld [vmem:[%s2 + $0xa8] sm:$0xff]
    %v47 = vld [vmem:[%s2 + $0xb0] sm:$0xff]
    %v48 = vld [vmem:[%s2 + $0xb8] sm:$0xff]
    %v49 = vld [vmem:[%s2 + $0xc0] sm:$0xff]
    %v50 = vld [vmem:[%s2 + $0xc8] sm:$0xff]
    %v51 = vld [vmem:[%s2 + $0xd0] sm:$0xff]
    %v52 = vld [vmem:[%s2 + $0xd8] sm:$0xff]
    %v53 = vld [vmem:[%s2 + $0xe0] sm:$0xff]
    %v54 = vld [vmem:[%s2 + $0xe8] sm:$0xff]
    %v55 = vld [vmem:[%s2 + $0xf0] sm:$0xff]
    %v56 = vld [vmem:[%s2 + $0xf8] sm:$0xff]
    %v57 = vld [vmem:[%s2 + $0x100] sm:$0xff]
    %v58 = vld [vmem:[%s2 + $0x108] sm:$0xff]
    %v59 = vld [vmem:[%s2 + $0x110] sm:$0xff]
    %v60 = vld [vmem:[%s2 + $0x118] sm:$0xff]
    %v61 = vld [vmem:[%s2 + $0x120] sm:$0xff]
    %v62 = vld [vmem:[%s2 + $0x128] sm:$0xff]
    %v63 = vld [vmem:[%s2 + $0x130] sm:$0xff]
    %v64 = vld [vmem:[%s2 + $0x138] sm:$0xff]
    %v65 = vld [vmem:[%s2 + $0x140] sm:$0xff]
    %v66 = vld [vmem:[%s2 + $0x148] sm:$0xff]
    %v67 = vld [vmem:[%s2 + $0x150] sm:$0xff]
    %v68 = vld [vmem:[%s2 + $0x158] sm:$0xff]
    %v69 = vld [vmem:[%s2 + $0x160] sm:$0xff]
    %v70 = vld [vmem:[%s2 + $0x168] sm:$0xff]
    %v71 = vld [vmem:[%s2 + $0x170] sm:$0xff]
    %v72 = vld [vmem:[%s2 + $0x178] sm:$0xff]
    %v73 = vld [vmem:[%s2 + $0x180] sm:$0xff]
    %v74 = vld [vmem:[%s2 + $0x188] sm:$0xff]
    %v75 = vld [vmem:[%s2 + $0x190] sm:$0xff]
    %v76 = vld [vmem:[%s2 + $0x198] sm:$0xff]
    %v77 = vld [vmem:[%s2 + $0x1a0] sm:$0xff]
    %v78 = vld [vmem:[%s2 + $0x1a8] sm:$0xff]
    %v79 = vld [vmem:[%s2 + $0x1b0] sm:$0xff]
    %v80 = vld [vmem:[%s2 + $0x1b8] sm:$0xff]
    %v81 = vld [vmem:[%s2 + $0x1c0] sm:$0xff]
    %v82 = vld [vmem:[%s2 + $0x1c8] sm:$0xff]
    %v83 = vld [vmem:[%s2 + $0x1d0] sm:$0xff]
    %v84 = vld [vmem:[%s2 + $0x1d8] sm:$0xff]
    %v85 = vld [vmem:[%s2 + $0x1e0] sm:$0xff]
    %v86 = vld [vmem:[%s2 + $0x1e8] sm:$0xff]
    %v87 = vld [vmem:[%s2 + $0x1f0] sm:$0xff]
    %v88 = vld [vmem:[%s2 + $0x1f8] sm:$0xff]
    %v89 = vld [vmem:[%s2 + $0x200] sm:$0xff]
    %v90 = vld [vmem:[%s2 + $0x208] sm:$0xff]
    %v91 = vld [vmem:[%s2 + $0x210] sm:$0xff]
    %v92 = vld [vmem:[%s2 + $0x218] sm:$0xff]
    %v93 = vld [vmem:[%s2 + $0x220] sm:$0xff]
    %v94 = vld [vmem:[%s2 + $0x228] sm:$0xff]
    %v95 = vld [vmem:[%s2 + $0x230] sm:$0xff]
    %v96 = vld [vmem:[%s2 + $0x238] sm:$0xff]
    %v97 = vld [vmem:[%s2 + $0x240] sm:$0xff]
    %v98 = vld [vmem:[%s2 + $0x248] sm:$0xff]
    %v99 = vld [vmem:[%s2 + $0x250] sm:$0xff]
    %v100 = vld [vmem:[%s2 + $0x258] sm:$0xff]
    %v101 = vld [vmem:[%s2 + $0x260] sm:$0xff]
    %v102 = vld [vmem:[%s2 + $0x268] sm:$0xff]
    %v103 = vld [vmem:[%s2 + $0x270] sm:$0xff]
    %v104 = vld [vmem:[%s2 + $0x278] sm:$0xff]
    %v105 = vld [vmem:[%s2 + $0x280] sm:$0xff]
    %v106 = vld [vmem:[%s2 + $0x288] sm:$0xff]
    %v107 = vld [vmem:[%s2 + $0x290] sm:$0xff]
    %v108 = vld [vmem:[%s2 + $0x298] sm:$0xff]
    %v109 = vld [vmem:[%s2 + $0x2a0] sm:$0xff]
    %v110 = vld [vmem:[%s2 + $0x2a8] sm:$0xff]
    %v111 = vld [vmem:[%s2 + $0x2b0] sm:$0xff]
    %v112 = vld [vmem:[%s2 + $0x2b8] sm:$0xff]
    %v113 = vld [vmem:[%s2 + $0x2c0] sm:$0xff]
    %v114 = vld [vmem:[%s2 + $0x2c8] sm:$0xff]
    %v115 = vld [vmem:[%s2 + $0x2d0] sm:$0xff]
    %v116 = vld [vmem:[%s2 + $0x2d8] sm:$0xff]
    %v117 = vld [vmem:[%s2 + $0x2e0] sm:$0xff]
    %v118 = vld [vmem:[%s2 + $0x2e8] sm:$0xff]
    %v119 = vld [vmem:[%s2 + $0x2f0] sm:$0xff]
    %v120 = vld [vmem:[%s2 + $0x2f8] sm:$0xff]
    %v121 = vld [vmem:[%s2 + $0x300] sm:$0xff]
    %v122 = vld [vmem:[%s2 + $0x308] sm:$0xff]
    %v123 = vld [vmem:[%s2 + $0x310] sm:$0xff]
    %v124 = vld [vmem:[%s2 + $0x318] sm:$0xff]
    %v125 = vld [vmem:[%s2 + $0x320] sm:$0xff]
    %v126 = vld [vmem:[%s2 + $0x328] sm:$0xff]
    %v127 = vld [vmem:[%s2 + $0x330] sm:$0xff]
    %v128 = vld [vmem:[%s2 + $0x338] sm:$0xff]
    %v129 = vld [vmem:[%s2 + $0x340] sm:$0xff]
    %v130 = vld [vmem:[%s2 + $0x348] sm:$0xff]
    %v131 = vld [vmem:[%s2 + $0x350] sm:$0xff]
    %v132 = vld [vmem:[%s2 + $0x358] sm:$0xff]
    %v133 = vld [vmem:[%s2 + $0x360] sm:$0xff]
    %v134 = vld [vmem:[%s2 + $0x368] sm:$0xff]
    %v135 = vld [vmem:[%s2 + $0x370] sm:$0xff]
    %v136 = vld [vmem:[%s2 + $0x378] sm:$0xff]
    %v137 = vld [vmem:[%s2 + $0x380] sm:$0xff]
    %v138 = vld [vmem:[%s2 + $0x388] sm:$0xff]
    %v139 = vld [vmem:[%s2 + $0x390] sm:$0xff]
    %v140 = vld [vmem:[%s2 + $0x398] sm:$0xff]
    %v141 = vld [vmem:[%s2 + $0x3a0] sm:$0xff]
    %v142 = vld [vmem:[%s2 + $0x3a8] sm:$0xff]
    %v143 = vld [vmem:[%s2 + $0x3b0] sm:$0xff]
    %v144 = vld [vmem:[%s2 + $0x3b8] sm:$0xff]
    %v145 = vld [vmem:[%s2 + $0x3c0] sm:$0xff]
    %v146 = vld [vmem:[%s2 + $0x3c8] sm:$0xff]
    %v147 = vld [vmem:[%s2 + $0x3d0] sm:$0xff]
    %v148 = vld [vmem:[%s2 + $0x3d8] sm:$0xff]
    %v149 = vld [vmem:[%s2 + $0x3e0] sm:$0xff]
    %v150 = vld [vmem:[%s2 + $0x3e8] sm:$0xff]
    %v151 = vld [vmem:[%s2 + $0x3f0] sm:$0xff]
    %v152 = vld [vmem:[%s2 + $0x3f8] sm:$0xff]
    %v153 = vld [vmem:[%s2 + $0x400] sm:$0xff]
    %v154 = vld [vmem:[%s2 + $0x408] sm:$0xff]
    %v155 = vld [vmem:[%s2 + $0x410] sm:$0xff]
    %v156 = vld [vmem:[%s2 + $0x418] sm:$0xff]
    %v157 = vld [vmem:[%s2 + $0x420] sm:$0xff]
    %v158 = vld [vmem:[%s2 + $0x428] sm:$0xff]
    %v159 = vld [vmem:[%s2 + $0x430] sm:$0xff]
    %v160 = vld [vmem:[%s2 + $0x438] sm:$0xff]
    %v161 = vld [vmem:[%s2 + $0x440] sm:$0xff]
    %v162 = vld [vmem:[%s2 + $0x448] sm:$0xff]
    %v163 = vld [vmem:[%s2 + $0x450] sm:$0xff]
    %v164 = vld [vmem:[%s2 + $0x458] sm:$0xff]
    %v165 = vld [vmem:[%s2 + $0x460] sm:$0xff]
    %v166 = vld [vmem:[%s2 + $0x468] sm:$0xff]
    %v167 = vld [vmem:[%s2 + $0x470] sm:$0xff]
    %v168 = vld [vmem:[%s2 + $0x478] sm:$0xff]
    %v169 = vld [vmem:[%s2 + $0x480] sm:$0xff]
    %v170 = vld [vmem:[%s2 + $0x488] sm:$0xff]
    %v171 = vld [vmem:[%s2 + $0x490] sm:$0xff]
    %v172 = vld [vmem:[%s2 + $0x498] sm:$0xff]
    %v173 = vld [vmem:[%s2 + $0x4a0] sm:$0xff]
    %v174 = vld [vmem:[%s2 + $0x4a8] sm:$0xff]
    %v175 = vld [vmem:[%s2 + $0x4b0] sm:$0xff]
    %v176 = vld [vmem:[%s2 + $0x4b8] sm:$0xff]
    %v177 = vld [vmem:[%s2 + $0x4c0] sm:$0xff]
    %v178 = vld [vmem:[%s2 + $0x4c8] sm:$0xff]
    %v179 = vld [vmem:[%s2 + $0x4d0] sm:$0xff]
    %v180 = vld [vmem:[%s2 + $0x4d8] sm:$0xff]
    %v181 = vld [vmem:[%s2 + $0x4e0] sm:$0xff]
    %v182 = vld [vmem:[%s2 + $0x4e8] sm:$0xff]
    %v183 = vld [vmem:[%s2 + $0x4f0] sm:$0xff]
    %v184 = vld [vmem:[%s2 + $0x4f8] sm:$0xff]
    %v185 = vld [vmem:[%s2 + $0x500] sm:$0xff]
    %v186 = vld [vmem:[%s2 + $0x508] sm:$0xff]
    %v187 = vld [vmem:[%s2 + $0x510] sm:$0xff]
    %v188 = vld [vmem:[%s2 + $0x518] sm:$0xff]
    %v189 = vld [vmem:[%s2 + $0x520] sm:$0xff]
    %v190 = vld [vmem:[%s2 + $0x528] sm:$0xff]
    %v191 = vld [vmem:[%s2 + $0x530] sm:$0xff]
    %v192 = vld [vmem:[%s2 + $0x538] sm:$0xff]
    %v193 = vld [vmem:[%s2 + $0x540] sm:$0xff]
    %v194 = vld [vmem:[%s2 + $0x548] sm:$0xff]
    %v195 = vld [vmem:[%s2 + $0x550] sm:$0xff]
    %v196 = vld [vmem:[%s2 + $0x558] sm:$0xff]
    %v197 = vld [vmem:[%s2 + $0x560] sm:$0xff]
    %v198 = vld [vmem:[%s2 + $0x568] sm:$0xff]
    %v199 = vld [vmem:[%s2 + $0x570] sm:$0xff]
    %v200 = vld [vmem:[%s2 + $0x578] sm:$0xff]
    %v201 = vld [vmem:[%s2 + $0x580] sm:$0xff]
    %v202 = vld [vmem:[%s2 + $0x588] sm:$0xff]
    %v203 = vld [vmem:[%s2 + $0x590] sm:$0xff]
    %v204 = vld [vmem:[%s2 + $0x598] sm:$0xff]
    %v205 = vld [vmem:[%s2 + $0x5a0] sm:$0xff]
    %v206 = vld [vmem:[%s2 + $0x5a8] sm:$0xff]
    %v207 = vld [vmem:[%s2 + $0x5b0] sm:$0xff]
    %v208 = vld [vmem:[%s2 + $0x5b8] sm:$0xff]
    %v209 = vld [vmem:[%s2 + $0x5c0] sm:$0xff]
    %v210 = vld [vmem:[%s2 + $0x5c8] sm:$0xff]
    %v211 = vld [vmem:[%s2 + $0x5d0] sm:$0xff]
    %v212 = vld [vmem:[%s2 + $0x5d8] sm:$0xff]
    %v213 = vld [vmem:[%s2 + $0x5e0] sm:$0xff]
    %v214 = vld [vmem:[%s2 + $0x5e8] sm:$0xff]
    %v215 = vld [vmem:[%s2 + $0x5f0] sm:$0xff]
    %v216 = vld [vmem:[%s2 + $0x5f8] sm:$0xff]
    %v217 = vld [vmem:[%s2 + $0x600] sm:$0xff]
    %v218 = vld [vmem:[%s2 + $0x608] sm:$0xff]
    %v219 = vld [vmem:[%s2 + $0x610] sm:$0xff]
    %v220 = vld [vmem:[%s2 + $0x618] sm:$0xff]
    %v221 = vld [vmem:[%s2 + $0x620] sm:$0xff]
    %v222 = vld [vmem:[%s2 + $0x628] sm:$0xff]
    %v223 = vld [vmem:[%s2 + $0x630] sm:$0xff]
    %v224 = vld [vmem:[%s2 + $0x638] sm:$0xff]
    %v225 = vld [vmem:[%s2 + $0x640] sm:$0xff]
    %v226 = vld [vmem:[%s2 + $0x648] sm:$0xff]
    %v227 = vld [vmem:[%s2 + $0x650] sm:$0xff]
    %v228 = vld [vmem:[%s2 + $0x658] sm:$0xff]
    %v229 = vld [vmem:[%s2 + $0x660] sm:$0xff]
    %v230 = vld [vmem:[%s2 + $0x668] sm:$0xff]
    %v231 = vld [vmem:[%s2 + $0x670] sm:$0xff]
    %v232 = vld [vmem:[%s2 + $0x678] sm:$0xff]
    %v233 = vld [vmem:[%s2 + $0x680] sm:$0xff]
    %v234 = vld [vmem:[%s2 + $0x688] sm:$0xff]
    %v235 = vld [vmem:[%s2 + $0x690] sm:$0xff]
    %v236 = vld [vmem:[%s2 + $0x698] sm:$0xff]
    %v237 = vld [vmem:[%s2 + $0x6a0] sm:$0xff]
    %v238 = vld [vmem:[%s2 + $0x6a8] sm:$0xff]
    %v239 = vld [vmem:[%s2 + $0x6b0] sm:$0xff]
    %v240 = vld [vmem:[%s2 + $0x6b8] sm:$0xff]
    %v241 = vld [vmem:[%s2 + $0x6c0] sm:$0xff]
    %v242 = vld [vmem:[%s2 + $0x6c8] sm:$0xff]
    %v243 = vld [vmem:[%s2 + $0x6d0] sm:$0xff]
    %v244 = vld [vmem:[%s2 + $0x6d8] sm:$0xff]
    %v245 = vld [vmem:[%s2 + $0x6e0] sm:$0xff]
    %v246 = vld [vmem:[%s2 + $0x6e8] sm:$0xff]
    %v247 = vld [vmem:[%s2 + $0x6f0] sm:$0xff]
    %v248 = vld [vmem:[%s2 + $0x6f8] sm:$0xff]
    %v249 = vld [vmem:[%s2 + $0x700] sm:$0xff]
    %v250 = vld [vmem:[%s2 + $0x708] sm:$0xff]
    %v251 = vld [vmem:[%s2 + $0x710] sm:$0xff]
    %v252 = vld [vmem:[%s2 + $0x718] sm:$0xff]
    %v253 = vld [vmem:[%s2 + $0x720] sm:$0xff]
    %v254 = vld [vmem:[%s2 + $0x728] sm:$0xff]
    %v255 = vld [vmem:[%s2 + $0x730] sm:$0xff]
    %v256 = vld [vmem:[%s2 + $0x738] sm:$0xff]
    %v257 = vld [vmem:[%s2 + $0x740] sm:$0xff]
    %v258 = vld [vmem:[%s2 + $0x748] sm:$0xff]
    %v259 = vld [vmem:[%s2 + $0x750] sm:$0xff]
    %v260 = vld [vmem:[%s2 + $0x758] sm:$0xff]
    %v261 = vld [vmem:[%s2 + $0x760] sm:$0xff]
    %v262 = vld [vmem:[%s2 + $0x768] sm:$0xff]
    %v263 = vld [vmem:[%s2 + $0x770] sm:$0xff]
    %v264 = vld [vmem:[%s2 + $0x778] sm:$0xff]
    %v265 = vld [vmem:[%s2 + $0x780] sm:$0xff]
    %v266 = vld [vmem:[%s2 + $0x788] sm:$0xff]
    %v267 = vld [vmem:[%s2 + $0x790] sm:$0xff]
    %v268 = vld [vmem:[%s2 + $0x798] sm:$0xff]
    %v269 = vld [vmem:[%s2 + $0x7a0] sm:$0xff]
    %v270 = vld [vmem:[%s2 + $0x7a8] sm:$0xff]
    %v271 = vld [vmem:[%s2 + $0x7b0] sm:$0xff]
    %v272 = vld [vmem:[%s2 + $0x7b8] sm:$0xff]
    %v273 = vld [vmem:[%s2 + $0x7c0] sm:$0xff]
    %v274 = vld [vmem:[%s2 + $0x7c8] sm:$0xff]
    %v275 = vld [vmem:[%s2 + $0x7d0] sm:$0xff]
    %v276 = vld [vmem:[%s2 + $0x7d8] sm:$0xff]
    %v277 = vld [vmem:[%s2 + $0x7e0] sm:$0xff]
    %v278 = vld [vmem:[%s2 + $0x7e8] sm:$0xff]
    %v279 = vld [vmem:[%s2 + $0x7f0] sm:$0xff]
    %v280 = vld [vmem:[%s2 + $0x7f8] sm:$0xff]
    %v281 = vpack.c.bf16 %v21, %v17
    %v282 = vpack.c.bf16 %v22, %v18
    %v283 = vpack.c.bf16 %v23, %v19
    %v284 = vpack.c.bf16 %v24, %v20
    %v285 = vld [vmem:[%s3] sm:$0xff]
    %v287 = vlaneseq
    %v288 = vshrl.u32 %v287, 7
    %v289 = vsub.s32 0, %v288
    %v290 = vrot.slane %v285, %v289
    %v291 = vlaneseq
    %v292 = vshrl.u32 %v291, 7
    %v293 = vsub.s32 1, %v292
    %v294 = vrot.slane %v285, %v293
    %v295 = vlaneseq
    %v296 = vshrl.u32 %v295, 7
    %v297 = vsub.s32 2, %v296
    %v298 = vrot.slane %v285, %v297
    %v299 = vlaneseq
    %v300 = vshrl.u32 %v299, 7
    %v301 = vsub.s32 3, %v300
    %v302 = vrot.slane %v285, %v301
    %v303 = vlaneseq
    %v304 = vshrl.u32 %v303, 7
    %v305 = vsub.s32 4, %v304
    %v306 = vrot.slane %v285, %v305
    %v307 = vlaneseq
    %v308 = vshrl.u32 %v307, 7
    %v309 = vsub.s32 5, %v308
    %v310 = vrot.slane %v285, %v309
    %v311 = vlaneseq
    %v312 = vshrl.u32 %v311, 7
    %v313 = vsub.s32 6, %v312
    %v314 = vrot.slane %v285, %v313
    %v315 = vlaneseq
    %v316 = vshrl.u32 %v315, 7
    %v317 = vsub.s32 7, %v316
    %v318 = vrot.slane %v285, %v317
    %v583 = vunpack.c.l.b16 %v25
    %v584 = vunpack.c.h.b16 %v25
    %v585 = vunpack.c.l.b16 %v26
    %v586 = vunpack.c.h.b16 %v26
    %v587 = vunpack.c.l.b16 %v27
    %v588 = vunpack.c.h.b16 %v27
    %v589 = vunpack.c.l.b16 %v28
    %v590 = vunpack.c.h.b16 %v28
    %v591 = vunpack.c.l.b16 %v29
    %v592 = vunpack.c.h.b16 %v29
    %v593 = vunpack.c.l.b16 %v30
    %v594 = vunpack.c.h.b16 %v30
    %v595 = vunpack.c.l.b16 %v31
    %v596 = vunpack.c.h.b16 %v31
    %v597 = vunpack.c.l.b16 %v32
    %v598 = vunpack.c.h.b16 %v32
    %v599 = vunpack.c.l.b16 %v33
    %v600 = vunpack.c.h.b16 %v33
    %v601 = vunpack.c.l.b16 %v34
    %v602 = vunpack.c.h.b16 %v34
    %v603 = vunpack.c.l.b16 %v35
    %v604 = vunpack.c.h.b16 %v35
    %v605 = vunpack.c.l.b16 %v36
    %v606 = vunpack.c.h.b16 %v36
    %v607 = vunpack.c.l.b16 %v37
    %v608 = vunpack.c.h.b16 %v37
    %v609 = vunpack.c.l.b16 %v38
    %v610 = vunpack.c.h.b16 %v38
    %v611 = vunpack.c.l.b16 %v39
    %v612 = vunpack.c.h.b16 %v39
    %v613 = vunpack.c.l.b16 %v40
    %v614 = vunpack.c.h.b16 %v40
    %v615 = vunpack.c.l.b16 %v41
    %v616 = vunpack.c.h.b16 %v41
    %v617 = vunpack.c.l.b16 %v42
    %v618 = vunpack.c.h.b16 %v42
    %v619 = vunpack.c.l.b16 %v43
    %v620 = vunpack.c.h.b16 %v43
    %v621 = vunpack.c.l.b16 %v44
    %v622 = vunpack.c.h.b16 %v44
    %v623 = vunpack.c.l.b16 %v45
    %v624 = vunpack.c.h.b16 %v45
    %v625 = vunpack.c.l.b16 %v46
    %v626 = vunpack.c.h.b16 %v46
    %v627 = vunpack.c.l.b16 %v47
    %v628 = vunpack.c.h.b16 %v47
    %v629 = vunpack.c.l.b16 %v48
    %v630 = vunpack.c.h.b16 %v48
    %v631 = vunpack.c.l.b16 %v49
    %v632 = vunpack.c.h.b16 %v49
    %v633 = vunpack.c.l.b16 %v50
    %v634 = vunpack.c.h.b16 %v50
    %v635 = vunpack.c.l.b16 %v51
    %v636 = vunpack.c.h.b16 %v51
    %v637 = vunpack.c.l.b16 %v52
    %v638 = vunpack.c.h.b16 %v52
    %v639 = vunpack.c.l.b16 %v53
    %v640 = vunpack.c.h.b16 %v53
    %v641 = vunpack.c.l.b16 %v54
    %v642 = vunpack.c.h.b16 %v54
    %v643 = vunpack.c.l.b16 %v55
    %v644 = vunpack.c.h.b16 %v55
    %v645 = vunpack.c.l.b16 %v56
    %v646 = vunpack.c.h.b16 %v56
    %v647 = vunpack.c.l.b16 %v57
    %v648 = vunpack.c.h.b16 %v57
    %v649 = vunpack.c.l.b16 %v58
    %v650 = vunpack.c.h.b16 %v58
    %v651 = vunpack.c.l.b16 %v59
    %v652 = vunpack.c.h.b16 %v59
    %v653 = vunpack.c.l.b16 %v60
    %v654 = vunpack.c.h.b16 %v60
    %v655 = vunpack.c.l.b16 %v61
    %v656 = vunpack.c.h.b16 %v61
    %v657 = vunpack.c.l.b16 %v62
    %v658 = vunpack.c.h.b16 %v62
    %v659 = vunpack.c.l.b16 %v63
    %v660 = vunpack.c.h.b16 %v63
    %v661 = vunpack.c.l.b16 %v64
    %v662 = vunpack.c.h.b16 %v64
    %v663 = vunpack.c.l.b16 %v65
    %v664 = vunpack.c.h.b16 %v65
    %v665 = vunpack.c.l.b16 %v66
    %v666 = vunpack.c.h.b16 %v66
    %v667 = vunpack.c.l.b16 %v67
    %v668 = vunpack.c.h.b16 %v67
    %v669 = vunpack.c.l.b16 %v68
    %v670 = vunpack.c.h.b16 %v68
    %v671 = vunpack.c.l.b16 %v69
    %v672 = vunpack.c.h.b16 %v69
    %v673 = vunpack.c.l.b16 %v70
    %v674 = vunpack.c.h.b16 %v70
    %v675 = vunpack.c.l.b16 %v71
    %v676 = vunpack.c.h.b16 %v71
    %v677 = vunpack.c.l.b16 %v72
    %v678 = vunpack.c.h.b16 %v72
    %v679 = vunpack.c.l.b16 %v73
    %v680 = vunpack.c.h.b16 %v73
    %v681 = vunpack.c.l.b16 %v74
    %v682 = vunpack.c.h.b16 %v74
    %v683 = vunpack.c.l.b16 %v75
    %v684 = vunpack.c.h.b16 %v75
    %v685 = vunpack.c.l.b16 %v76
    %v686 = vunpack.c.h.b16 %v76
    %v687 = vunpack.c.l.b16 %v77
    %v688 = vunpack.c.h.b16 %v77
    %v689 = vunpack.c.l.b16 %v78
    %v690 = vunpack.c.h.b16 %v78
    %v691 = vunpack.c.l.b16 %v79
    %v692 = vunpack.c.h.b16 %v79
    %v693 = vunpack.c.l.b16 %v80
    %v694 = vunpack.c.h.b16 %v80
    %v695 = vunpack.c.l.b16 %v81
    %v696 = vunpack.c.h.b16 %v81
    %v697 = vunpack.c.l.b16 %v82
    %v698 = vunpack.c.h.b16 %v82
    %v699 = vunpack.c.l.b16 %v83
    %v700 = vunpack.c.h.b16 %v83
    %v701 = vunpack.c.l.b16 %v84
    %v702 = vunpack.c.h.b16 %v84
    %v703 = vunpack.c.l.b16 %v85
    %v704 = vunpack.c.h.b16 %v85
    %v705 = vunpack.c.l.b16 %v86
    %v706 = vunpack.c.h.b16 %v86
    %v707 = vunpack.c.l.b16 %v87
    %v708 = vunpack.c.h.b16 %v87
    %v709 = vunpack.c.l.b16 %v88
    %v710 = vunpack.c.h.b16 %v88
    %v711 = vunpack.c.l.b16 %v89
    %v712 = vunpack.c.h.b16 %v89
    %v713 = vunpack.c.l.b16 %v90
    %v714 = vunpack.c.h.b16 %v90
    %v715 = vunpack.c.l.b16 %v91
    %v716 = vunpack.c.h.b16 %v91
    %v717 = vunpack.c.l.b16 %v92
    %v718 = vunpack.c.h.b16 %v92
    %v719 = vunpack.c.l.b16 %v93
    %v720 = vunpack.c.h.b16 %v93
    %v721 = vunpack.c.l.b16 %v94
    %v722 = vunpack.c.h.b16 %v94
    %v723 = vunpack.c.l.b16 %v95
    %v724 = vunpack.c.h.b16 %v95
    %v725 = vunpack.c.l.b16 %v96
    %v726 = vunpack.c.h.b16 %v96
    %v727 = vunpack.c.l.b16 %v97
    %v728 = vunpack.c.h.b16 %v97
    %v729 = vunpack.c.l.b16 %v98
    %v730 = vunpack.c.h.b16 %v98
    %v731 = vunpack.c.l.b16 %v99
    %v732 = vunpack.c.h.b16 %v99
    %v733 = vunpack.c.l.b16 %v100
    %v734 = vunpack.c.h.b16 %v100
    %v735 = vunpack.c.l.b16 %v101
    %v736 = vunpack.c.h.b16 %v101
    %v737 = vunpack.c.l.b16 %v102
    %v738 = vunpack.c.h.b16 %v102
    %v739 = vunpack.c.l.b16 %v103
    %v740 = vunpack.c.h.b16 %v103
    %v741 = vunpack.c.l.b16 %v104
    %v742 = vunpack.c.h.b16 %v104
    %v743 = vunpack.c.l.b16 %v105
    %v744 = vunpack.c.h.b16 %v105
    %v745 = vunpack.c.l.b16 %v106
    %v746 = vunpack.c.h.b16 %v106
    %v747 = vunpack.c.l.b16 %v107
    %v748 = vunpack.c.h.b16 %v107
    %v749 = vunpack.c.l.b16 %v108
    %v750 = vunpack.c.h.b16 %v108
    %v751 = vunpack.c.l.b16 %v109
    %v752 = vunpack.c.h.b16 %v109
    %v753 = vunpack.c.l.b16 %v110
    %v754 = vunpack.c.h.b16 %v110
    %v755 = vunpack.c.l.b16 %v111
    %v756 = vunpack.c.h.b16 %v111
    %v757 = vunpack.c.l.b16 %v112
    %v758 = vunpack.c.h.b16 %v112
    %v759 = vunpack.c.l.b16 %v113
    %v760 = vunpack.c.h.b16 %v113
    %v761 = vunpack.c.l.b16 %v114
    %v762 = vunpack.c.h.b16 %v114
    %v763 = vunpack.c.l.b16 %v115
    %v764 = vunpack.c.h.b16 %v115
    %v765 = vunpack.c.l.b16 %v116
    %v766 = vunpack.c.h.b16 %v116
    %v767 = vunpack.c.l.b16 %v117
    %v768 = vunpack.c.h.b16 %v117
    %v769 = vunpack.c.l.b16 %v118
    %v770 = vunpack.c.h.b16 %v118
    %v771 = vunpack.c.l.b16 %v119
    %v772 = vunpack.c.h.b16 %v119
    %v773 = vunpack.c.l.b16 %v120
    %v774 = vunpack.c.h.b16 %v120
    %v775 = vunpack.c.l.b16 %v121
    %v776 = vunpack.c.h.b16 %v121
    %v777 = vunpack.c.l.b16 %v122
    %v778 = vunpack.c.h.b16 %v122
    %v779 = vunpack.c.l.b16 %v123
    %v780 = vunpack.c.h.b16 %v123
    %v781 = vunpack.c.l.b16 %v124
    %v782 = vunpack.c.h.b16 %v124
    %v783 = vunpack.c.l.b16 %v125
    %v784 = vunpack.c.h.b16 %v125
    %v785 = vunpack.c.l.b16 %v126
    %v786 = vunpack.c.h.b16 %v126
    %v787 = vunpack.c.l.b16 %v127
    %v788 = vunpack.c.h.b16 %v127
    %v789 = vunpack.c.l.b16 %v128
    %v790 = vunpack.c.h.b16 %v128
    %v791 = vunpack.c.l.b16 %v129
    %v792 = vunpack.c.h.b16 %v129
    %v793 = vunpack.c.l.b16 %v130
    %v794 = vunpack.c.h.b16 %v130
    %v795 = vunpack.c.l.b16 %v131
    %v796 = vunpack.c.h.b16 %v131
    %v797 = vunpack.c.l.b16 %v132
    %v798 = vunpack.c.h.b16 %v132
    %v799 = vunpack.c.l.b16 %v133
    %v800 = vunpack.c.h.b16 %v133
    %v801 = vunpack.c.l.b16 %v134
    %v802 = vunpack.c.h.b16 %v134
    %v803 = vunpack.c.l.b16 %v135
    %v804 = vunpack.c.h.b16 %v135
    %v805 = vunpack.c.l.b16 %v136
    %v806 = vunpack.c.h.b16 %v136
    %v807 = vunpack.c.l.b16 %v137
    %v808 = vunpack.c.h.b16 %v137
    %v809 = vunpack.c.l.b16 %v138
    %v810 = vunpack.c.h.b16 %v138
    %v811 = vunpack.c.l.b16 %v139
    %v812 = vunpack.c.h.b16 %v139
    %v813 = vunpack.c.l.b16 %v140
    %v814 = vunpack.c.h.b16 %v140
    %v815 = vunpack.c.l.b16 %v141
    %v816 = vunpack.c.h.b16 %v141
    %v817 = vunpack.c.l.b16 %v142
    %v818 = vunpack.c.h.b16 %v142
    %v819 = vunpack.c.l.b16 %v143
    %v820 = vunpack.c.h.b16 %v143
    %v821 = vunpack.c.l.b16 %v144
    %v822 = vunpack.c.h.b16 %v144
    %v823 = vunpack.c.l.b16 %v145
    %v824 = vunpack.c.h.b16 %v145
    %v825 = vunpack.c.l.b16 %v146
    %v826 = vunpack.c.h.b16 %v146
    %v827 = vunpack.c.l.b16 %v147
    %v828 = vunpack.c.h.b16 %v147
    %v829 = vunpack.c.l.b16 %v148
    %v830 = vunpack.c.h.b16 %v148
    %v831 = vunpack.c.l.b16 %v149
    %v832 = vunpack.c.h.b16 %v149
    %v833 = vunpack.c.l.b16 %v150
    %v834 = vunpack.c.h.b16 %v150
    %v835 = vunpack.c.l.b16 %v151
    %v836 = vunpack.c.h.b16 %v151
    %v837 = vunpack.c.l.b16 %v152
    %v838 = vunpack.c.h.b16 %v152
    %v839 = vunpack.c.l.b16 %v153
    %v840 = vunpack.c.h.b16 %v153
    %v841 = vunpack.c.l.b16 %v154
    %v842 = vunpack.c.h.b16 %v154
    %v843 = vunpack.c.l.b16 %v155
    %v844 = vunpack.c.h.b16 %v155
    %v845 = vunpack.c.l.b16 %v156
    %v846 = vunpack.c.h.b16 %v156
    %v847 = vunpack.c.l.b16 %v157
    %v848 = vunpack.c.h.b16 %v157
    %v849 = vunpack.c.l.b16 %v158
    %v850 = vunpack.c.h.b16 %v158
    %v851 = vunpack.c.l.b16 %v159
    %v852 = vunpack.c.h.b16 %v159
    %v853 = vunpack.c.l.b16 %v160
    %v854 = vunpack.c.h.b16 %v160
    %v855 = vunpack.c.l.b16 %v161
    %v856 = vunpack.c.h.b16 %v161
    %v857 = vunpack.c.l.b16 %v162
    %v858 = vunpack.c.h.b16 %v162
    %v859 = vunpack.c.l.b16 %v163
    %v860 = vunpack.c.h.b16 %v163
    %v861 = vunpack.c.l.b16 %v164
    %v862 = vunpack.c.h.b16 %v164
    %v863 = vunpack.c.l.b16 %v165
    %v864 = vunpack.c.h.b16 %v165
    %v865 = vunpack.c.l.b16 %v166
    %v866 = vunpack.c.h.b16 %v166
    %v867 = vunpack.c.l.b16 %v167
    %v868 = vunpack.c.h.b16 %v167
    %v869 = vunpack.c.l.b16 %v168
    %v870 = vunpack.c.h.b16 %v168
    %v871 = vunpack.c.l.b16 %v169
    %v872 = vunpack.c.h.b16 %v169
    %v873 = vunpack.c.l.b16 %v170
    %v874 = vunpack.c.h.b16 %v170
    %v875 = vunpack.c.l.b16 %v171
    %v876 = vunpack.c.h.b16 %v171
    %v877 = vunpack.c.l.b16 %v172
    %v878 = vunpack.c.h.b16 %v172
    %v879 = vunpack.c.l.b16 %v173
    %v880 = vunpack.c.h.b16 %v173
    %v881 = vunpack.c.l.b16 %v174
    %v882 = vunpack.c.h.b16 %v174
    %v883 = vunpack.c.l.b16 %v175
    %v884 = vunpack.c.h.b16 %v175
    %v885 = vunpack.c.l.b16 %v176
    %v886 = vunpack.c.h.b16 %v176
    %v887 = vunpack.c.l.b16 %v177
    %v888 = vunpack.c.h.b16 %v177
    %v889 = vunpack.c.l.b16 %v178
    %v890 = vunpack.c.h.b16 %v178
    %v891 = vunpack.c.l.b16 %v179
    %v892 = vunpack.c.h.b16 %v179
    %v893 = vunpack.c.l.b16 %v180
    %v894 = vunpack.c.h.b16 %v180
    %v895 = vunpack.c.l.b16 %v181
    %v896 = vunpack.c.h.b16 %v181
    %v897 = vunpack.c.l.b16 %v182
    %v898 = vunpack.c.h.b16 %v182
    %v899 = vunpack.c.l.b16 %v183
    %v900 = vunpack.c.h.b16 %v183
    %v901 = vunpack.c.l.b16 %v184
    %v902 = vunpack.c.h.b16 %v184
    %v903 = vunpack.c.l.b16 %v185
    %v904 = vunpack.c.h.b16 %v185
    %v905 = vunpack.c.l.b16 %v186
    %v906 = vunpack.c.h.b16 %v186
    %v907 = vunpack.c.l.b16 %v187
    %v908 = vunpack.c.h.b16 %v187
    %v909 = vunpack.c.l.b16 %v188
    %v910 = vunpack.c.h.b16 %v188
    %v911 = vunpack.c.l.b16 %v189
    %v912 = vunpack.c.h.b16 %v189
    %v913 = vunpack.c.l.b16 %v190
    %v914 = vunpack.c.h.b16 %v190
    %v915 = vunpack.c.l.b16 %v191
    %v916 = vunpack.c.h.b16 %v191
    %v917 = vunpack.c.l.b16 %v192
    %v918 = vunpack.c.h.b16 %v192
    %v919 = vunpack.c.l.b16 %v193
    %v920 = vunpack.c.h.b16 %v193
    %v921 = vunpack.c.l.b16 %v194
    %v922 = vunpack.c.h.b16 %v194
    %v923 = vunpack.c.l.b16 %v195
    %v924 = vunpack.c.h.b16 %v195
    %v925 = vunpack.c.l.b16 %v196
    %v926 = vunpack.c.h.b16 %v196
    %v927 = vunpack.c.l.b16 %v197
    %v928 = vunpack.c.h.b16 %v197
    %v929 = vunpack.c.l.b16 %v198
    %v930 = vunpack.c.h.b16 %v198
    %v931 = vunpack.c.l.b16 %v199
    %v932 = vunpack.c.h.b16 %v199
    %v933 = vunpack.c.l.b16 %v200
    %v934 = vunpack.c.h.b16 %v200
    %v935 = vunpack.c.l.b16 %v201
    %v936 = vunpack.c.h.b16 %v201
    %v937 = vunpack.c.l.b16 %v202
    %v938 = vunpack.c.h.b16 %v202
    %v939 = vunpack.c.l.b16 %v203
    %v940 = vunpack.c.h.b16 %v203
    %v941 = vunpack.c.l.b16 %v204
    %v942 = vunpack.c.h.b16 %v204
    %v943 = vunpack.c.l.b16 %v205
    %v944 = vunpack.c.h.b16 %v205
    %v945 = vunpack.c.l.b16 %v206
    %v946 = vunpack.c.h.b16 %v206
    %v947 = vunpack.c.l.b16 %v207
    %v948 = vunpack.c.h.b16 %v207
    %v949 = vunpack.c.l.b16 %v208
    %v950 = vunpack.c.h.b16 %v208
    %v951 = vunpack.c.l.b16 %v209
    %v952 = vunpack.c.h.b16 %v209
    %v953 = vunpack.c.l.b16 %v210
    %v954 = vunpack.c.h.b16 %v210
    %v955 = vunpack.c.l.b16 %v211
    %v956 = vunpack.c.h.b16 %v211
    %v957 = vunpack.c.l.b16 %v212
    %v958 = vunpack.c.h.b16 %v212
    %v959 = vunpack.c.l.b16 %v213
    %v960 = vunpack.c.h.b16 %v213
    %v961 = vunpack.c.l.b16 %v214
    %v962 = vunpack.c.h.b16 %v214
    %v963 = vunpack.c.l.b16 %v215
    %v964 = vunpack.c.h.b16 %v215
    %v965 = vunpack.c.l.b16 %v216
    %v966 = vunpack.c.h.b16 %v216
    %v967 = vunpack.c.l.b16 %v217
    %v968 = vunpack.c.h.b16 %v217
    %v969 = vunpack.c.l.b16 %v218
    %v970 = vunpack.c.h.b16 %v218
    %v971 = vunpack.c.l.b16 %v219
    %v972 = vunpack.c.h.b16 %v219
    %v973 = vunpack.c.l.b16 %v220
    %v974 = vunpack.c.h.b16 %v220
    %v975 = vunpack.c.l.b16 %v221
    %v976 = vunpack.c.h.b16 %v221
    %v977 = vunpack.c.l.b16 %v222
    %v978 = vunpack.c.h.b16 %v222
    %v979 = vunpack.c.l.b16 %v223
    %v980 = vunpack.c.h.b16 %v223
    %v981 = vunpack.c.l.b16 %v224
    %v982 = vunpack.c.h.b16 %v224
    %v983 = vunpack.c.l.b16 %v225
    %v984 = vunpack.c.h.b16 %v225
    %v985 = vunpack.c.l.b16 %v226
    %v986 = vunpack.c.h.b16 %v226
    %v987 = vunpack.c.l.b16 %v227
    %v988 = vunpack.c.h.b16 %v227
    %v989 = vunpack.c.l.b16 %v228
    %v990 = vunpack.c.h.b16 %v228
    %v991 = vunpack.c.l.b16 %v229
    %v992 = vunpack.c.h.b16 %v229
    %v993 = vunpack.c.l.b16 %v230
    %v994 = vunpack.c.h.b16 %v230
    %v995 = vunpack.c.l.b16 %v231
    %v996 = vunpack.c.h.b16 %v231
    %v997 = vunpack.c.l.b16 %v232
    %v998 = vunpack.c.h.b16 %v232
    %v999 = vunpack.c.l.b16 %v233
    %v1000 = vunpack.c.h.b16 %v233
    %v1001 = vunpack.c.l.b16 %v234
    %v1002 = vunpack.c.h.b16 %v234
    %v1003 = vunpack.c.l.b16 %v235
    %v1004 = vunpack.c.h.b16 %v235
    %v1005 = vunpack.c.l.b16 %v236
    %v1006 = vunpack.c.h.b16 %v236
    %v1007 = vunpack.c.l.b16 %v237
    %v1008 = vunpack.c.h.b16 %v237
    %v1009 = vunpack.c.l.b16 %v238
    %v1010 = vunpack.c.h.b16 %v238
    %v1011 = vunpack.c.l.b16 %v239
    %v1012 = vunpack.c.h.b16 %v239
    %v1013 = vunpack.c.l.b16 %v240
    %v1014 = vunpack.c.h.b16 %v240
    %v1015 = vunpack.c.l.b16 %v241
    %v1016 = vunpack.c.h.b16 %v241
    %v1017 = vunpack.c.l.b16 %v242
    %v1018 = vunpack.c.h.b16 %v242
    %v1019 = vunpack.c.l.b16 %v243
    %v1020 = vunpack.c.h.b16 %v243
    %v1021 = vunpack.c.l.b16 %v244
    %v1022 = vunpack.c.h.b16 %v244
    %v1023 = vunpack.c.l.b16 %v245
    %v1024 = vunpack.c.h.b16 %v245
    %v1025 = vunpack.c.l.b16 %v246
    %v1026 = vunpack.c.h.b16 %v246
    %v1027 = vunpack.c.l.b16 %v247
    %v1028 = vunpack.c.h.b16 %v247
    %v1029 = vunpack.c.l.b16 %v248
    %v1030 = vunpack.c.h.b16 %v248
    %v1031 = vunpack.c.l.b16 %v249
    %v1032 = vunpack.c.h.b16 %v249
    %v1033 = vunpack.c.l.b16 %v250
    %v1034 = vunpack.c.h.b16 %v250
    %v1035 = vunpack.c.l.b16 %v251
    %v1036 = vunpack.c.h.b16 %v251
    %v1037 = vunpack.c.l.b16 %v252
    %v1038 = vunpack.c.h.b16 %v252
    %v1039 = vunpack.c.l.b16 %v253
    %v1040 = vunpack.c.h.b16 %v253
    %v1041 = vunpack.c.l.b16 %v254
    %v1042 = vunpack.c.h.b16 %v254
    %v1043 = vunpack.c.l.b16 %v255
    %v1044 = vunpack.c.h.b16 %v255
    %v1045 = vunpack.c.l.b16 %v256
    %v1046 = vunpack.c.h.b16 %v256
    %v1047 = vunpack.c.l.b16 %v257
    %v1048 = vunpack.c.h.b16 %v257
    %v1049 = vunpack.c.l.b16 %v258
    %v1050 = vunpack.c.h.b16 %v258
    %v1051 = vunpack.c.l.b16 %v259
    %v1052 = vunpack.c.h.b16 %v259
    %v1053 = vunpack.c.l.b16 %v260
    %v1054 = vunpack.c.h.b16 %v260
    %v1055 = vunpack.c.l.b16 %v261
    %v1056 = vunpack.c.h.b16 %v261
    %v1057 = vunpack.c.l.b16 %v262
    %v1058 = vunpack.c.h.b16 %v262
    %v1059 = vunpack.c.l.b16 %v263
    %v1060 = vunpack.c.h.b16 %v263
    %v1061 = vunpack.c.l.b16 %v264
    %v1062 = vunpack.c.h.b16 %v264
    %v1063 = vunpack.c.l.b16 %v265
    %v1064 = vunpack.c.h.b16 %v265
    %v1065 = vunpack.c.l.b16 %v266
    %v1066 = vunpack.c.h.b16 %v266
    %v1067 = vunpack.c.l.b16 %v267
    %v1068 = vunpack.c.h.b16 %v267
    %v1069 = vunpack.c.l.b16 %v268
    %v1070 = vunpack.c.h.b16 %v268
    %v1071 = vunpack.c.l.b16 %v269
    %v1072 = vunpack.c.h.b16 %v269
    %v1073 = vunpack.c.l.b16 %v270
    %v1074 = vunpack.c.h.b16 %v270
    %v1075 = vunpack.c.l.b16 %v271
    %v1076 = vunpack.c.h.b16 %v271
    %v1077 = vunpack.c.l.b16 %v272
    %v1078 = vunpack.c.h.b16 %v272
    %v1079 = vunpack.c.l.b16 %v273
    %v1080 = vunpack.c.h.b16 %v273
    %v1081 = vunpack.c.l.b16 %v274
    %v1082 = vunpack.c.h.b16 %v274
    %v1083 = vunpack.c.l.b16 %v275
    %v1084 = vunpack.c.h.b16 %v275
    %v1085 = vunpack.c.l.b16 %v276
    %v1086 = vunpack.c.h.b16 %v276
    %v1087 = vunpack.c.l.b16 %v277
    %v1088 = vunpack.c.h.b16 %v277
    %v1089 = vunpack.c.l.b16 %v278
    %v1090 = vunpack.c.h.b16 %v278
    %v1091 = vunpack.c.l.b16 %v279
    %v1092 = vunpack.c.h.b16 %v279
    %v1093 = vunpack.c.l.b16 %v280
    %v1094 = vunpack.c.h.b16 %v280
    %v1095 = vpack.c.b16 %v591, %v583
    %v1096 = vpack.c.b16 %v592, %v584
    %v1097 = vpack.c.b16 %v593, %v585
    %v1098 = vpack.c.b16 %v594, %v586
    %v1099 = vpack.c.b16 %v595, %v587
    %v1100 = vpack.c.b16 %v596, %v588
    %v1101 = vpack.c.b16 %v597, %v589
    %v1102 = vpack.c.b16 %v598, %v590
    %v1103 = vpack.c.b16 %v607, %v599
    %v1104 = vpack.c.b16 %v608, %v600
    %v1105 = vpack.c.b16 %v609, %v601
    %v1106 = vpack.c.b16 %v610, %v602
    %v1107 = vpack.c.b16 %v611, %v603
    %v1108 = vpack.c.b16 %v612, %v604
    %v1109 = vpack.c.b16 %v613, %v605
    %v1110 = vpack.c.b16 %v614, %v606
    %v1111 = vpack.c.b16 %v623, %v615
    %v1112 = vpack.c.b16 %v624, %v616
    %v1113 = vpack.c.b16 %v625, %v617
    %v1114 = vpack.c.b16 %v626, %v618
    %v1115 = vpack.c.b16 %v627, %v619
    %v1116 = vpack.c.b16 %v628, %v620
    %v1117 = vpack.c.b16 %v629, %v621
    %v1118 = vpack.c.b16 %v630, %v622
    %v1119 = vpack.c.b16 %v639, %v631
    %v1120 = vpack.c.b16 %v640, %v632
    %v1121 = vpack.c.b16 %v641, %v633
    %v1122 = vpack.c.b16 %v642, %v634
    %v1123 = vpack.c.b16 %v643, %v635
    %v1124 = vpack.c.b16 %v644, %v636
    %v1125 = vpack.c.b16 %v645, %v637
    %v1126 = vpack.c.b16 %v646, %v638
    %v1127 = vpack.c.b16 %v655, %v647
    %v1128 = vpack.c.b16 %v656, %v648
    %v1129 = vpack.c.b16 %v657, %v649
    %v1130 = vpack.c.b16 %v658, %v650
    %v1131 = vpack.c.b16 %v659, %v651
    %v1132 = vpack.c.b16 %v660, %v652
    %v1133 = vpack.c.b16 %v661, %v653
    %v1134 = vpack.c.b16 %v662, %v654
    %v1135 = vpack.c.b16 %v671, %v663
    %v1136 = vpack.c.b16 %v672, %v664
    %v1137 = vpack.c.b16 %v673, %v665
    %v1138 = vpack.c.b16 %v674, %v666
    %v1139 = vpack.c.b16 %v675, %v667
    %v1140 = vpack.c.b16 %v676, %v668
    %v1141 = vpack.c.b16 %v677, %v669
    %v1142 = vpack.c.b16 %v678, %v670
    %v1143 = vpack.c.b16 %v687, %v679
    %v1144 = vpack.c.b16 %v688, %v680
    %v1145 = vpack.c.b16 %v689, %v681
    %v1146 = vpack.c.b16 %v690, %v682
    %v1147 = vpack.c.b16 %v691, %v683
    %v1148 = vpack.c.b16 %v692, %v684
    %v1149 = vpack.c.b16 %v693, %v685
    %v1150 = vpack.c.b16 %v694, %v686
    %v1151 = vpack.c.b16 %v703, %v695
    %v1152 = vpack.c.b16 %v704, %v696
    %v1153 = vpack.c.b16 %v705, %v697
    %v1154 = vpack.c.b16 %v706, %v698
    %v1155 = vpack.c.b16 %v707, %v699
    %v1156 = vpack.c.b16 %v708, %v700
    %v1157 = vpack.c.b16 %v709, %v701
    %v1158 = vpack.c.b16 %v710, %v702
    %v1159 = vpack.c.b16 %v719, %v711
    %v1160 = vpack.c.b16 %v720, %v712
    %v1161 = vpack.c.b16 %v721, %v713
    %v1162 = vpack.c.b16 %v722, %v714
    %v1163 = vpack.c.b16 %v723, %v715
    %v1164 = vpack.c.b16 %v724, %v716
    %v1165 = vpack.c.b16 %v725, %v717
    %v1166 = vpack.c.b16 %v726, %v718
    %v1167 = vpack.c.b16 %v735, %v727
    %v1168 = vpack.c.b16 %v736, %v728
    %v1169 = vpack.c.b16 %v737, %v729
    %v1170 = vpack.c.b16 %v738, %v730
    %v1171 = vpack.c.b16 %v739, %v731
    %v1172 = vpack.c.b16 %v740, %v732
    %v1173 = vpack.c.b16 %v741, %v733
    %v1174 = vpack.c.b16 %v742, %v734
    %v1175 = vpack.c.b16 %v751, %v743
    %v1176 = vpack.c.b16 %v752, %v744
    %v1177 = vpack.c.b16 %v753, %v745
    %v1178 = vpack.c.b16 %v754, %v746
    %v1179 = vpack.c.b16 %v755, %v747
    %v1180 = vpack.c.b16 %v756, %v748
    %v1181 = vpack.c.b16 %v757, %v749
    %v1182 = vpack.c.b16 %v758, %v750
    %v1183 = vpack.c.b16 %v767, %v759
    %v1184 = vpack.c.b16 %v768, %v760
    %v1185 = vpack.c.b16 %v769, %v761
    %v1186 = vpack.c.b16 %v770, %v762
    %v1187 = vpack.c.b16 %v771, %v763
    %v1188 = vpack.c.b16 %v772, %v764
    %v1189 = vpack.c.b16 %v773, %v765
    %v1190 = vpack.c.b16 %v774, %v766
    %v1191 = vpack.c.b16 %v783, %v775
    %v1192 = vpack.c.b16 %v784, %v776
    %v1193 = vpack.c.b16 %v785, %v777
    %v1194 = vpack.c.b16 %v786, %v778
    %v1195 = vpack.c.b16 %v787, %v779
    %v1196 = vpack.c.b16 %v788, %v780
    %v1197 = vpack.c.b16 %v789, %v781
    %v1198 = vpack.c.b16 %v790, %v782
    %v1199 = vpack.c.b16 %v799, %v791
    %v1200 = vpack.c.b16 %v800, %v792
    %v1201 = vpack.c.b16 %v801, %v793
    %v1202 = vpack.c.b16 %v802, %v794
    %v1203 = vpack.c.b16 %v803, %v795
    %v1204 = vpack.c.b16 %v804, %v796
    %v1205 = vpack.c.b16 %v805, %v797
    %v1206 = vpack.c.b16 %v806, %v798
    %v1207 = vpack.c.b16 %v815, %v807
    %v1208 = vpack.c.b16 %v816, %v808
    %v1209 = vpack.c.b16 %v817, %v809
    %v1210 = vpack.c.b16 %v818, %v810
    %v1211 = vpack.c.b16 %v819, %v811
    %v1212 = vpack.c.b16 %v820, %v812
    %v1213 = vpack.c.b16 %v821, %v813
    %v1214 = vpack.c.b16 %v822, %v814
    %v1215 = vpack.c.b16 %v831, %v823
    %v1216 = vpack.c.b16 %v832, %v824
    %v1217 = vpack.c.b16 %v833, %v825
    %v1218 = vpack.c.b16 %v834, %v826
    %v1219 = vpack.c.b16 %v835, %v827
    %v1220 = vpack.c.b16 %v836, %v828
    %v1221 = vpack.c.b16 %v837, %v829
    %v1222 = vpack.c.b16 %v838, %v830
    %v1223 = vpack.c.b16 %v847, %v839
    %v1224 = vpack.c.b16 %v848, %v840
    %v1225 = vpack.c.b16 %v849, %v841
    %v1226 = vpack.c.b16 %v850, %v842
    %v1227 = vpack.c.b16 %v851, %v843
    %v1228 = vpack.c.b16 %v852, %v844
    %v1229 = vpack.c.b16 %v853, %v845
    %v1230 = vpack.c.b16 %v854, %v846
    %v1231 = vpack.c.b16 %v863, %v855
    %v1232 = vpack.c.b16 %v864, %v856
    %v1233 = vpack.c.b16 %v865, %v857
    %v1234 = vpack.c.b16 %v866, %v858
    %v1235 = vpack.c.b16 %v867, %v859
    %v1236 = vpack.c.b16 %v868, %v860
    %v1237 = vpack.c.b16 %v869, %v861
    %v1238 = vpack.c.b16 %v870, %v862
    %v1239 = vpack.c.b16 %v879, %v871
    %v1240 = vpack.c.b16 %v880, %v872
    %v1241 = vpack.c.b16 %v881, %v873
    %v1242 = vpack.c.b16 %v882, %v874
    %v1243 = vpack.c.b16 %v883, %v875
    %v1244 = vpack.c.b16 %v884, %v876
    %v1245 = vpack.c.b16 %v885, %v877
    %v1246 = vpack.c.b16 %v886, %v878
    %v1247 = vpack.c.b16 %v895, %v887
    %v1248 = vpack.c.b16 %v896, %v888
    %v1249 = vpack.c.b16 %v897, %v889
    %v1250 = vpack.c.b16 %v898, %v890
    %v1251 = vpack.c.b16 %v899, %v891
    %v1252 = vpack.c.b16 %v900, %v892
    %v1253 = vpack.c.b16 %v901, %v893
    %v1254 = vpack.c.b16 %v902, %v894
    %v1255 = vpack.c.b16 %v911, %v903
    %v1256 = vpack.c.b16 %v912, %v904
    %v1257 = vpack.c.b16 %v913, %v905
    %v1258 = vpack.c.b16 %v914, %v906
    %v1259 = vpack.c.b16 %v915, %v907
    %v1260 = vpack.c.b16 %v916, %v908
    %v1261 = vpack.c.b16 %v917, %v909
    %v1262 = vpack.c.b16 %v918, %v910
    %v1263 = vpack.c.b16 %v927, %v919
    %v1264 = vpack.c.b16 %v928, %v920
    %v1265 = vpack.c.b16 %v929, %v921
    %v1266 = vpack.c.b16 %v930, %v922
    %v1267 = vpack.c.b16 %v931, %v923
    %v1268 = vpack.c.b16 %v932, %v924
    %v1269 = vpack.c.b16 %v933, %v925
    %v1270 = vpack.c.b16 %v934, %v926
    %v1271 = vpack.c.b16 %v943, %v935
    %v1272 = vpack.c.b16 %v944, %v936
    %v1273 = vpack.c.b16 %v945, %v937
    %v1274 = vpack.c.b16 %v946, %v938
    %v1275 = vpack.c.b16 %v947, %v939
    %v1276 = vpack.c.b16 %v948, %v940
    %v1277 = vpack.c.b16 %v949, %v941
    %v1278 = vpack.c.b16 %v950, %v942
    %v1279 = vpack.c.b16 %v959, %v951
    %v1280 = vpack.c.b16 %v960, %v952
    %v1281 = vpack.c.b16 %v961, %v953
    %v1282 = vpack.c.b16 %v962, %v954
    %v1283 = vpack.c.b16 %v963, %v955
    %v1284 = vpack.c.b16 %v964, %v956
    %v1285 = vpack.c.b16 %v965, %v957
    %v1286 = vpack.c.b16 %v966, %v958
    %v1287 = vpack.c.b16 %v975, %v967
    %v1288 = vpack.c.b16 %v976, %v968
    %v1289 = vpack.c.b16 %v977, %v969
    %v1290 = vpack.c.b16 %v978, %v970
    %v1291 = vpack.c.b16 %v979, %v971
    %v1292 = vpack.c.b16 %v980, %v972
    %v1293 = vpack.c.b16 %v981, %v973
    %v1294 = vpack.c.b16 %v982, %v974
    %v1295 = vpack.c.b16 %v991, %v983
    %v1296 = vpack.c.b16 %v992, %v984
    %v1297 = vpack.c.b16 %v993, %v985
    %v1298 = vpack.c.b16 %v994, %v986
    %v1299 = vpack.c.b16 %v995, %v987
    %v1300 = vpack.c.b16 %v996, %v988
    %v1301 = vpack.c.b16 %v997, %v989
    %v1302 = vpack.c.b16 %v998, %v990
    %v1303 = vpack.c.b16 %v1007, %v999
    %v1304 = vpack.c.b16 %v1008, %v1000
    %v1305 = vpack.c.b16 %v1009, %v1001
    %v1306 = vpack.c.b16 %v1010, %v1002
    %v1307 = vpack.c.b16 %v1011, %v1003
    %v1308 = vpack.c.b16 %v1012, %v1004
    %v1309 = vpack.c.b16 %v1013, %v1005
    %v1310 = vpack.c.b16 %v1014, %v1006
    %v1311 = vpack.c.b16 %v1023, %v1015
    %v1312 = vpack.c.b16 %v1024, %v1016
    %v1313 = vpack.c.b16 %v1025, %v1017
    %v1314 = vpack.c.b16 %v1026, %v1018
    %v1315 = vpack.c.b16 %v1027, %v1019
    %v1316 = vpack.c.b16 %v1028, %v1020
    %v1317 = vpack.c.b16 %v1029, %v1021
    %v1318 = vpack.c.b16 %v1030, %v1022
    %v1319 = vpack.c.b16 %v1039, %v1031
    %v1320 = vpack.c.b16 %v1040, %v1032
    %v1321 = vpack.c.b16 %v1041, %v1033
    %v1322 = vpack.c.b16 %v1042, %v1034
    %v1323 = vpack.c.b16 %v1043, %v1035
    %v1324 = vpack.c.b16 %v1044, %v1036
    %v1325 = vpack.c.b16 %v1045, %v1037
    %v1326 = vpack.c.b16 %v1046, %v1038
    %v1327 = vpack.c.b16 %v1055, %v1047
    %v1328 = vpack.c.b16 %v1056, %v1048
    %v1329 = vpack.c.b16 %v1057, %v1049
    %v1330 = vpack.c.b16 %v1058, %v1050
    %v1331 = vpack.c.b16 %v1059, %v1051
    %v1332 = vpack.c.b16 %v1060, %v1052
    %v1333 = vpack.c.b16 %v1061, %v1053
    %v1334 = vpack.c.b16 %v1062, %v1054
    %v1335 = vpack.c.b16 %v1071, %v1063
    %v1336 = vpack.c.b16 %v1072, %v1064
    %v1337 = vpack.c.b16 %v1073, %v1065
    %v1338 = vpack.c.b16 %v1074, %v1066
    %v1339 = vpack.c.b16 %v1075, %v1067
    %v1340 = vpack.c.b16 %v1076, %v1068
    %v1341 = vpack.c.b16 %v1077, %v1069
    %v1342 = vpack.c.b16 %v1078, %v1070
    %v1343 = vpack.c.b16 %v1087, %v1079
    %v1344 = vpack.c.b16 %v1088, %v1080
    %v1345 = vpack.c.b16 %v1089, %v1081
    %v1346 = vpack.c.b16 %v1090, %v1082
    %v1347 = vpack.c.b16 %v1091, %v1083
    %v1348 = vpack.c.b16 %v1092, %v1084
    %v1349 = vpack.c.b16 %v1093, %v1085
    %v1350 = vpack.c.b16 %v1094, %v1086
    %1607 = vmatprep.subr.bf16.mxu0 %v1152
    %1608 = vmatpush1.bf16.msra.mxu0 %v1151
    %1609 = vmatprep.subr.bf16.mxu0 %v1144
    %1610 = vmatpush1.bf16.msra.mxu0 %v1143
    %1611 = vmatprep.subr.bf16.mxu0 %v1136
    %1612 = vmatpush1.bf16.msra.mxu0 %v1135
    %1613 = vmatprep.subr.bf16.mxu0 %v1128
    %1614 = vmatpush1.bf16.msra.mxu0 %v1127
    %1615 = vmatprep.subr.bf16.mxu0 %v1120
    %1616 = vmatpush1.bf16.msra.mxu0 %v1119
    %1617 = vmatprep.subr.bf16.mxu0 %v1112
    %1618 = vmatpush1.bf16.msra.mxu0 %v1111
    %1619 = vmatprep.subr.bf16.mxu0 %v1104
    %1620 = vmatpush1.bf16.msra.mxu0 %v1103
    %1621 = vmatprep.subr.bf16.mxu0 %v1096
    %1622 = vmatpush1.bf16.msra.mxu0 %v1095
    %1623 = vmatprep.subr.bf16.mxu0 %v1216
    %1624 = vmatpush2.bf16.msra.mxu0 %v1215
    %1625 = vmatprep.subr.bf16.mxu0 %v1208
    %1626 = vmatpush2.bf16.msra.mxu0 %v1207
    %1627 = vmatprep.subr.bf16.mxu0 %v1200
    %1628 = vmatpush2.bf16.msra.mxu0 %v1199
    %1629 = vmatprep.subr.bf16.mxu0 %v1192
    %1630 = vmatpush2.bf16.msra.mxu0 %v1191
    %1631 = vmatprep.subr.bf16.mxu0 %v1184
    %1632 = vmatpush2.bf16.msra.mxu0 %v1183
    %1633 = vmatprep.subr.bf16.mxu0 %v1176
    %1634 = vmatpush2.bf16.msra.mxu0 %v1175
    %1635 = vmatprep.subr.bf16.mxu0 %v1168
    %1636 = vmatpush2.bf16.msra.mxu0 %v1167
    %1637 = vmatprep.subr.bf16.mxu0 %v1160
    %1638 = vmatpush2.bf16.msra.mxu0 %v1159
    %1639 = vmatprep.mubr.bf16.mxu0 %v282
    %1640 = vmatmul.mubr.bf16.gmra.mxu0 %v281
    %v1641 = vpop.f32.mrf.mxu0
    %v1642 = vadd.f32 %v290, %v1641
    %v1643 = vpop.f32.mrf.mxu0
    %v1644 = vadd.f32 %v294, %v1643
    %v1645 = vpop.f32.mrf.mxu0
    %v1646 = vadd.f32 %v290, %v1645
    %v1647 = vpop.f32.mrf.mxu0
    %v1648 = vadd.f32 %v294, %v1647
    %1649 = vdwg.mxu0
    %1650 = vmatprep.subr.bf16.mxu0 %v1280
    %1651 = vmatpush1.bf16.msra.mxu0 %v1279
    %1652 = vmatprep.subr.bf16.mxu0 %v1272
    %1653 = vmatpush1.bf16.msra.mxu0 %v1271
    %1654 = vmatprep.subr.bf16.mxu0 %v1264
    %1655 = vmatpush1.bf16.msra.mxu0 %v1263
    %1656 = vmatprep.subr.bf16.mxu0 %v1256
    %1657 = vmatpush1.bf16.msra.mxu0 %v1255
    %1658 = vmatprep.subr.bf16.mxu0 %v1248
    %1659 = vmatpush1.bf16.msra.mxu0 %v1247
    %1660 = vmatprep.subr.bf16.mxu0 %v1240
    %1661 = vmatpush1.bf16.msra.mxu0 %v1239
    %1662 = vmatprep.subr.bf16.mxu0 %v1232
    %1663 = vmatpush1.bf16.msra.mxu0 %v1231
    %1664 = vmatprep.subr.bf16.mxu0 %v1224
    %1665 = vmatpush1.bf16.msra.mxu0 %v1223
    %1666 = vmatprep.subr.bf16.mxu0 %v1344
    %1667 = vmatpush2.bf16.msra.mxu0 %v1343
    %1668 = vmatprep.subr.bf16.mxu0 %v1336
    %1669 = vmatpush2.bf16.msra.mxu0 %v1335
    %1670 = vmatprep.subr.bf16.mxu0 %v1328
    %1671 = vmatpush2.bf16.msra.mxu0 %v1327
    %1672 = vmatprep.subr.bf16.mxu0 %v1320
    %1673 = vmatpush2.bf16.msra.mxu0 %v1319
    %1674 = vmatprep.subr.bf16.mxu0 %v1312
    %1675 = vmatpush2.bf16.msra.mxu0 %v1311
    %1676 = vmatprep.subr.bf16.mxu0 %v1304
    %1677 = vmatpush2.bf16.msra.mxu0 %v1303
    %1678 = vmatprep.subr.bf16.mxu0 %v1296
    %1679 = vmatpush2.bf16.msra.mxu0 %v1295
    %1680 = vmatprep.subr.bf16.mxu0 %v1288
    %1681 = vmatpush2.bf16.msra.mxu0 %v1287
    %1682 = vmatprep.mubr.bf16.mxu0 %v284
    %1683 = vmatmul.mubr.bf16.gmra.mxu0 %v283
    %v1684 = vpop.f32.mrf.mxu0
    %v1685 = vadd.f32 %v1642, %v1684
    %v1686 = vpop.f32.mrf.mxu0
    %v1687 = vadd.f32 %v1644, %v1686
    %v1688 = vpop.f32.mrf.mxu0
    %v1689 = vadd.f32 %v1646, %v1688
    %v1690 = vpop.f32.mrf.mxu0
    %v1691 = vadd.f32 %v1648, %v1690
    %1692 = vdwg.mxu0
    %1693 = vmatprep.subr.bf16.mxu0 %v1154
    %1694 = vmatpush1.bf16.msra.mxu0 %v1153
    %1695 = vmatprep.subr.bf16.mxu0 %v1146
    %1696 = vmatpush1.bf16.msra.mxu0 %v1145
    %1697 = vmatprep.subr.bf16.mxu0 %v1138
    %1698 = vmatpush1.bf16.msra.mxu0 %v1137
    %1699 = vmatprep.subr.bf16.mxu0 %v1130
    %1700 = vmatpush1.bf16.msra.mxu0 %v1129
    %1701 = vmatprep.subr.bf16.mxu0 %v1122
    %1702 = vmatpush1.bf16.msra.mxu0 %v1121
    %1703 = vmatprep.subr.bf16.mxu0 %v1114
    %1704 = vmatpush1.bf16.msra.mxu0 %v1113
    %1705 = vmatprep.subr.bf16.mxu0 %v1106
    %1706 = vmatpush1.bf16.msra.mxu0 %v1105
    %1707 = vmatprep.subr.bf16.mxu0 %v1098
    %1708 = vmatpush1.bf16.msra.mxu0 %v1097
    %1709 = vmatprep.subr.bf16.mxu0 %v1218
    %1710 = vmatpush2.bf16.msra.mxu0 %v1217
    %1711 = vmatprep.subr.bf16.mxu0 %v1210
    %1712 = vmatpush2.bf16.msra.mxu0 %v1209
    %1713 = vmatprep.subr.bf16.mxu0 %v1202
    %1714 = vmatpush2.bf16.msra.mxu0 %v1201
    %1715 = vmatprep.subr.bf16.mxu0 %v1194
    %1716 = vmatpush2.bf16.msra.mxu0 %v1193
    %1717 = vmatprep.subr.bf16.mxu0 %v1186
    %1718 = vmatpush2.bf16.msra.mxu0 %v1185
    %1719 = vmatprep.subr.bf16.mxu0 %v1178
    %1720 = vmatpush2.bf16.msra.mxu0 %v1177
    %1721 = vmatprep.subr.bf16.mxu0 %v1170
    %1722 = vmatpush2.bf16.msra.mxu0 %v1169
    %1723 = vmatprep.subr.bf16.mxu0 %v1162
    %1724 = vmatpush2.bf16.msra.mxu0 %v1161
    %1725 = vmatprep.mubr.bf16.mxu0 %v282
    %1726 = vmatmul.mubr.bf16.gmra.mxu0 %v281
    %v1727 = vpop.f32.mrf.mxu0
    %v1728 = vadd.f32 %v298, %v1727
    %v1729 = vpop.f32.mrf.mxu0
    %v1730 = vadd.f32 %v302, %v1729
    %v1731 = vpop.f32.mrf.mxu0
    %v1732 = vadd.f32 %v298, %v1731
    %v1733 = vpop.f32.mrf.mxu0
    %v1734 = vadd.f32 %v302, %v1733
    %1735 = vdwg.mxu0
    %1736 = vmatprep.subr.bf16.mxu0 %v1282
    %1737 = vmatpush1.bf16.msra.mxu0 %v1281
    %1738 = vmatprep.subr.bf16.mxu0 %v1274
    %1739 = vmatpush1.bf16.msra.mxu0 %v1273
    %1740 = vmatprep.subr.bf16.mxu0 %v1266
    %1741 = vmatpush1.bf16.msra.mxu0 %v1265
    %1742 = vmatprep.subr.bf16.mxu0 %v1258
    %1743 = vmatpush1.bf16.msra.mxu0 %v1257
    %1744 = vmatprep.subr.bf16.mxu0 %v1250
    %1745 = vmatpush1.bf16.msra.mxu0 %v1249
    %1746 = vmatprep.subr.bf16.mxu0 %v1242
    %1747 = vmatpush1.bf16.msra.mxu0 %v1241
    %1748 = vmatprep.subr.bf16.mxu0 %v1234
    %1749 = vmatpush1.bf16.msra.mxu0 %v1233
    %1750 = vmatprep.subr.bf16.mxu0 %v1226
    %1751 = vmatpush1.bf16.msra.mxu0 %v1225
    %1752 = vmatprep.subr.bf16.mxu0 %v1346
    %1753 = vmatpush2.bf16.msra.mxu0 %v1345
    %1754 = vmatprep.subr.bf16.mxu0 %v1338
    %1755 = vmatpush2.bf16.msra.mxu0 %v1337
    %1756 = vmatprep.subr.bf16.mxu0 %v1330
    %1757 = vmatpush2.bf16.msra.mxu0 %v1329
    %1758 = vmatprep.subr.bf16.mxu0 %v1322
    %1759 = vmatpush2.bf16.msra.mxu0 %v1321
    %1760 = vmatprep.subr.bf16.mxu0 %v1314
    %1761 = vmatpush2.bf16.msra.mxu0 %v1313
    %1762 = vmatprep.subr.bf16.mxu0 %v1306
    %1763 = vmatpush2.bf16.msra.mxu0 %v1305
    %1764 = vmatprep.subr.bf16.mxu0 %v1298
    %1765 = vmatpush2.bf16.msra.mxu0 %v1297
    %1766 = vmatprep.subr.bf16.mxu0 %v1290
    %1767 = vmatpush2.bf16.msra.mxu0 %v1289
    %1768 = vmatprep.mubr.bf16.mxu0 %v284
    %1769 = vmatmul.mubr.bf16.gmra.mxu0 %v283
    %v1770 = vpop.f32.mrf.mxu0
    %v1771 = vadd.f32 %v1728, %v1770
    %v1772 = vpop.f32.mrf.mxu0
    %v1773 = vadd.f32 %v1730, %v1772
    %v1774 = vpop.f32.mrf.mxu0
    %v1775 = vadd.f32 %v1732, %v1774
    %v1776 = vpop.f32.mrf.mxu0
    %v1777 = vadd.f32 %v1734, %v1776
    %1778 = vdwg.mxu0
    %1779 = vmatprep.subr.bf16.mxu0 %v1156
    %1780 = vmatpush1.bf16.msra.mxu0 %v1155
    %1781 = vmatprep.subr.bf16.mxu0 %v1148
    %1782 = vmatpush1.bf16.msra.mxu0 %v1147
    %1783 = vmatprep.subr.bf16.mxu0 %v1140
    %1784 = vmatpush1.bf16.msra.mxu0 %v1139
    %1785 = vmatprep.subr.bf16.mxu0 %v1132
    %1786 = vmatpush1.bf16.msra.mxu0 %v1131
    %1787 = vmatprep.subr.bf16.mxu0 %v1124
    %1788 = vmatpush1.bf16.msra.mxu0 %v1123
    %1789 = vmatprep.subr.bf16.mxu0 %v1116
    %1790 = vmatpush1.bf16.msra.mxu0 %v1115
    %1791 = vmatprep.subr.bf16.mxu0 %v1108
    %1792 = vmatpush1.bf16.msra.mxu0 %v1107
    %1793 = vmatprep.subr.bf16.mxu0 %v1100
    %1794 = vmatpush1.bf16.msra.mxu0 %v1099
    %1795 = vmatprep.subr.bf16.mxu0 %v1220
    %1796 = vmatpush2.bf16.msra.mxu0 %v1219
    %1797 = vmatprep.subr.bf16.mxu0 %v1212
    %1798 = vmatpush2.bf16.msra.mxu0 %v1211
    %1799 = vmatprep.subr.bf16.mxu0 %v1204
    %1800 = vmatpush2.bf16.msra.mxu0 %v1203
    %1801 = vmatprep.subr.bf16.mxu0 %v1196
    %1802 = vmatpush2.bf16.msra.mxu0 %v1195
    %1803 = vmatprep.subr.bf16.mxu0 %v1188
    %1804 = vmatpush2.bf16.msra.mxu0 %v1187
    %1805 = vmatprep.subr.bf16.mxu0 %v1180
    %1806 = vmatpush2.bf16.msra.mxu0 %v1179
    %1807 = vmatprep.subr.bf16.mxu0 %v1172
    %1808 = vmatpush2.bf16.msra.mxu0 %v1171
    %1809 = vmatprep.subr.bf16.mxu0 %v1164
    %1810 = vmatpush2.bf16.msra.mxu0 %v1163
    %1811 = vmatprep.mubr.bf16.mxu0 %v282
    %1812 = vmatmul.mubr.bf16.gmra.mxu0 %v281
    %v1813 = vpop.f32.mrf.mxu0
    %v1814 = vadd.f32 %v306, %v1813
    %v1815 = vpop.f32.mrf.mxu0
    %v1816 = vadd.f32 %v310, %v1815
    %v1817 = vpop.f32.mrf.mxu0
    %v1818 = vadd.f32 %v306, %v1817
    %v1819 = vpop.f32.mrf.mxu0
    %v1820 = vadd.f32 %v310, %v1819
    %1821 = vdwg.mxu0
    %1822 = vmatprep.subr.bf16.mxu0 %v1284
    %1823 = vmatpush1.bf16.msra.mxu0 %v1283
    %1824 = vmatprep.subr.bf16.mxu0 %v1276
    %1825 = vmatpush1.bf16.msra.mxu0 %v1275
    %1826 = vmatprep.subr.bf16.mxu0 %v1268
    %1827 = vmatpush1.bf16.msra.mxu0 %v1267
    %1828 = vmatprep.subr.bf16.mxu0 %v1260
    %1829 = vmatpush1.bf16.msra.mxu0 %v1259
    %1830 = vmatprep.subr.bf16.mxu0 %v1252
    %1831 = vmatpush1.bf16.msra.mxu0 %v1251
    %1832 = vmatprep.subr.bf16.mxu0 %v1244
    %1833 = vmatpush1.bf16.msra.mxu0 %v1243
    %1834 = vmatprep.subr.bf16.mxu0 %v1236
    %1835 = vmatpush1.bf16.msra.mxu0 %v1235
    %1836 = vmatprep.subr.bf16.mxu0 %v1228
    %1837 = vmatpush1.bf16.msra.mxu0 %v1227
    %1838 = vmatprep.subr.bf16.mxu0 %v1348
    %1839 = vmatpush2.bf16.msra.mxu0 %v1347
    %1840 = vmatprep.subr.bf16.mxu0 %v1340
    %1841 = vmatpush2.bf16.msra.mxu0 %v1339
    %1842 = vmatprep.subr.bf16.mxu0 %v1332
    %1843 = vmatpush2.bf16.msra.mxu0 %v1331
    %1844 = vmatprep.subr.bf16.mxu0 %v1324
    %1845 = vmatpush2.bf16.msra.mxu0 %v1323
    %1846 = vmatprep.subr.bf16.mxu0 %v1316
    %1847 = vmatpush2.bf16.msra.mxu0 %v1315
    %1848 = vmatprep.subr.bf16.mxu0 %v1308
    %1849 = vmatpush2.bf16.msra.mxu0 %v1307
    %1850 = vmatprep.subr.bf16.mxu0 %v1300
    %1851 = vmatpush2.bf16.msra.mxu0 %v1299
    %1852 = vmatprep.subr.bf16.mxu0 %v1292
    %1853 = vmatpush2.bf16.msra.mxu0 %v1291
    %1854 = vmatprep.mubr.bf16.mxu0 %v284
    %1855 = vmatmul.mubr.bf16.gmra.mxu0 %v283
    %v1856 = vpop.f32.mrf.mxu0
    %v1857 = vadd.f32 %v1814, %v1856
    %v1858 = vpop.f32.mrf.mxu0
    %v1859 = vadd.f32 %v1816, %v1858
    %v1860 = vpop.f32.mrf.mxu0
    %v1861 = vadd.f32 %v1818, %v1860
    %v1862 = vpop.f32.mrf.mxu0
    %v1863 = vadd.f32 %v1820, %v1862
    %1864 = vdwg.mxu0
    %1865 = vmatprep.subr.bf16.mxu0 %v1158
    %1866 = vmatpush1.bf16.msra.mxu0 %v1157
    %1867 = vmatprep.subr.bf16.mxu0 %v1150
    %1868 = vmatpush1.bf16.msra.mxu0 %v1149
    %1869 = vmatprep.subr.bf16.mxu0 %v1142
    %1870 = vmatpush1.bf16.msra.mxu0 %v1141
    %1871 = vmatprep.subr.bf16.mxu0 %v1134
    %1872 = vmatpush1.bf16.msra.mxu0 %v1133
    %1873 = vmatprep.subr.bf16.mxu0 %v1126
    %1874 = vmatpush1.bf16.msra.mxu0 %v1125
    %1875 = vmatprep.subr.bf16.mxu0 %v1118
    %1876 = vmatpush1.bf16.msra.mxu0 %v1117
    %1877 = vmatprep.subr.bf16.mxu0 %v1110
    %1878 = vmatpush1.bf16.msra.mxu0 %v1109
    %1879 = vmatprep.subr.bf16.mxu0 %v1102
    %1880 = vmatpush1.bf16.msra.mxu0 %v1101
    %1881 = vmatprep.subr.bf16.mxu0 %v1222
    %1882 = vmatpush2.bf16.msra.mxu0 %v1221
    %1883 = vmatprep.subr.bf16.mxu0 %v1214
    %1884 = vmatpush2.bf16.msra.mxu0 %v1213
    %1885 = vmatprep.subr.bf16.mxu0 %v1206
    %1886 = vmatpush2.bf16.msra.mxu0 %v1205
    %1887 = vmatprep.subr.bf16.mxu0 %v1198
    %1888 = vmatpush2.bf16.msra.mxu0 %v1197
    %1889 = vmatprep.subr.bf16.mxu0 %v1190
    %1890 = vmatpush2.bf16.msra.mxu0 %v1189
    %1891 = vmatprep.subr.bf16.mxu0 %v1182
    %1892 = vmatpush2.bf16.msra.mxu0 %v1181
    %1893 = vmatprep.subr.bf16.mxu0 %v1174
    %1894 = vmatpush2.bf16.msra.mxu0 %v1173
    %1895 = vmatprep.subr.bf16.mxu0 %v1166
    %1896 = vmatpush2.bf16.msra.mxu0 %v1165
    %1897 = vmatprep.mubr.bf16.mxu0 %v282
    %1898 = vmatmul.mubr.bf16.gmra.mxu0 %v281
    %v1899 = vpop.f32.mrf.mxu0
    %v1900 = vadd.f32 %v314, %v1899
    %v1901 = vpop.f32.mrf.mxu0
    %v1902 = vadd.f32 %v318, %v1901
    %v1903 = vpop.f32.mrf.mxu0
    %v1904 = vadd.f32 %v314, %v1903
    %v1905 = vpop.f32.mrf.mxu0
    %v1906 = vadd.f32 %v318, %v1905
    %1907 = vdwg.mxu0
    %1908 = vmatprep.subr.bf16.mxu0 %v1286
    %1909 = vmatpush1.bf16.msra.mxu0 %v1285
    %1910 = vmatprep.subr.bf16.mxu0 %v1278
    %1911 = vmatpush1.bf16.msra.mxu0 %v1277
    %1912 = vmatprep.subr.bf16.mxu0 %v1270
    %1913 = vmatpush1.bf16.msra.mxu0 %v1269
    %1914 = vmatprep.subr.bf16.mxu0 %v1262
    %1915 = vmatpush1.bf16.msra.mxu0 %v1261
    %1916 = vmatprep.subr.bf16.mxu0 %v1254
    %1917 = vmatpush1.bf16.msra.mxu0 %v1253
    %1918 = vmatprep.subr.bf16.mxu0 %v1246
    %1919 = vmatpush1.bf16.msra.mxu0 %v1245
    %1920 = vmatprep.subr.bf16.mxu0 %v1238
    %1921 = vmatpush1.bf16.msra.mxu0 %v1237
    %1922 = vmatprep.subr.bf16.mxu0 %v1230
    %1923 = vmatpush1.bf16.msra.mxu0 %v1229
    %1924 = vmatprep.subr.bf16.mxu0 %v1350
    %1925 = vmatpush2.bf16.msra.mxu0 %v1349
    %1926 = vmatprep.subr.bf16.mxu0 %v1342
    %1927 = vmatpush2.bf16.msra.mxu0 %v1341
    %1928 = vmatprep.subr.bf16.mxu0 %v1334
    %1929 = vmatpush2.bf16.msra.mxu0 %v1333
    %1930 = vmatprep.subr.bf16.mxu0 %v1326
    %1931 = vmatpush2.bf16.msra.mxu0 %v1325
    %1932 = vmatprep.subr.bf16.mxu0 %v1318
    %1933 = vmatpush2.bf16.msra.mxu0 %v1317
    %1934 = vmatprep.subr.bf16.mxu0 %v1310
    %1935 = vmatpush2.bf16.msra.mxu0 %v1309
    %1936 = vmatprep.subr.bf16.mxu0 %v1302
    %1937 = vmatpush2.bf16.msra.mxu0 %v1301
    %1938 = vmatprep.subr.bf16.mxu0 %v1294
    %1939 = vmatpush2.bf16.msra.mxu0 %v1293
    %1940 = vmatprep.mubr.bf16.mxu0 %v284
    %1941 = vmatmul.mubr.bf16.gmra.mxu0 %v283
    %v1942 = vpop.f32.mrf.mxu0
    %v1943 = vadd.f32 %v1900, %v1942
    %v1944 = vpop.f32.mrf.mxu0
    %v1945 = vadd.f32 %v1902, %v1944
    %v1946 = vpop.f32.mrf.mxu0
    %v1947 = vadd.f32 %v1904, %v1946
    %v1948 = vpop.f32.mrf.mxu0
    %v1949 = vadd.f32 %v1906, %v1948
    %1950 = vdwg.mxu0
    %v1951 = vmax.f32 %v1685, 0.0
    %v1952 = vmax.f32 %v1687, 0.0
    %v1953 = vmax.f32 %v1771, 0.0
    %v1954 = vmax.f32 %v1773, 0.0
    %v1955 = vmax.f32 %v1857, 0.0
    %v1956 = vmax.f32 %v1859, 0.0
    %v1957 = vmax.f32 %v1943, 0.0
    %v1958 = vmax.f32 %v1945, 0.0
    %v1959 = vmax.f32 %v1689, 0.0
    %v1960 = vmax.f32 %v1691, 0.0
    %v1961 = vmax.f32 %v1775, 0.0
    %v1962 = vmax.f32 %v1777, 0.0
    %v1963 = vmax.f32 %v1861, 0.0
    %v1964 = vmax.f32 %v1863, 0.0
    %v1965 = vmax.f32 %v1947, 0.0
    %v1966 = vmax.f32 %v1949, 0.0
    %1967 = vst [vmem:[#allocation4] sm:$0xff] %v1951
    %1968 = vst [vmem:[#allocation4 + $0x8] sm:$0xff] %v1952
    %1969 = vst [vmem:[#allocation4 + $0x10] sm:$0xff] %v1953
    %1970 = vst [vmem:[#allocation4 + $0x18] sm:$0xff] %v1954
    %1971 = vst [vmem:[#allocation4 + $0x20] sm:$0xff] %v1955
    %1972 = vst [vmem:[#allocation4 + $0x28] sm:$0xff] %v1956
    %1973 = vst [vmem:[#allocation4 + $0x30] sm:$0xff] %v1957
    %1974 = vst [vmem:[#allocation4 + $0x38] sm:$0xff] %v1958
    %1975 = vst [vmem:[#allocation4 + $0x40] sm:$0xff] %v1959
    %1976 = vst [vmem:[#allocation4 + $0x48] sm:$0xff] %v1960
    %1977 = vst [vmem:[#allocation4 + $0x50] sm:$0xff] %v1961
    %1978 = vst [vmem:[#allocation4 + $0x58] sm:$0xff] %v1962
    %1979 = vst [vmem:[#allocation4 + $0x60] sm:$0xff] %v1963
    %1980 = vst [vmem:[#allocation4 + $0x68] sm:$0xff] %v1964
    %1981 = vst [vmem:[#allocation4 + $0x70] sm:$0xff] %v1965
    %1982 = vst [vmem:[#allocation4 + $0x78] sm:$0xff] %v1966
    // Predicated region
    $region14: #{summation_dt_resnet_forward.1} parent=1 // pred_check
      _
    $region15: #{summation_dt_resnet_forward.1} parent=1 // pred_check_branch
      %1984 = sbr.rel (0) target = $region17
    $region16: #{summation_dt_resnet_forward.1} parent=1 // pred_region
      %s1986 = ssub.s32 2048, 2048
      %1987 = vsyncadd [#allocation5], %s1986
      %s1988 = sshll.u32 [#allocation4], 4
      %s1989 = int_to_ptr.vmem [resolvable:$true] %s1988
      %1994 = dma.vmem_to_hbm [thread:$0]  %s1989, 2048, %s4, [#allocation5], 1024, 1024, 64
    $region17: #{summation_dt_resnet_forward.1} parent=1 // pred_fallthru
      _
    // Predicated region
    $region18: #{summation_dt_resnet_forward.1} parent=1 // pred_check
      _
    $region19: #{summation_dt_resnet_forward.1} parent=1 // pred_check_branch
      %1996 = sbr.rel (0) target = $region21
    $region20: #{summation_dt_resnet_forward.1} parent=1 // pred_region
      %1997 = dma.done [#allocation5], 2048
    $region21: #{summation_dt_resnet_forward.1} parent=1 // pred_fallthru
      _
    %1998 = vsyncpa [#allocation5], 1

</llo_original>
